<compile_context>
chip_gen: v7x
topology: tpu7x:2x2x1
jax: 0.10.0
libtpu: 0.0.40
codegen_flags: <defaults>
</compile_context>

<pallas_src>
import jax
import jax.numpy as jnp
from jax import lax
from jax.experimental import pallas as pl
from jax.experimental.pallas import tpu as pltpu


# --------------------------------------------------------------------------
# Fused Pallas kernel: all RNN layers (wavefront) + FC head in one invocation
# --------------------------------------------------------------------------
def _make_rnn_kernel(num_layers, T, B, H):
    """Builds the fused kernel for a fixed (num_layers, T, B, H)."""

    def kernel(*refs):
        # refs = [x, (wih, whh, b) * L, wfc, bfc, out]
        x_ref = refs[0]
        layer_refs = refs[1:1 + 3 * num_layers]
        wfc_ref, bfc_ref, out_ref = refs[1 + 3 * num_layers:]

        # Hoist every weight / bias load out of the unrolled wavefront loop.
        wih = [layer_refs[3 * l][...] for l in range(num_layers)]        # bf16
        whh = [layer_refs[3 * l + 1][...] for l in range(num_layers)]    # bf16
        b = [layer_refs[3 * l + 2][...] for l in range(num_layers)]      # f32 (1, H)
        # Broadcast deeper-layer biases once (not per unrolled step).
        b_full = [None] + [jnp.broadcast_to(b[l], (B, H))
                           for l in range(1, num_layers)]

        # Layer 0: bulk input projection for every (t, b) row at once -- one
        # MXU pass, completely off the serial recurrence path.  Layer-0 bias is
        # folded in here.
        xproj0 = jnp.dot(x_ref[...].astype(jnp.bfloat16), wih[0],
                         preferred_element_type=jnp.float32) + b[0]      # (T*B, H)

        h = [jnp.zeros((B, H), jnp.float32) for _ in range(num_layers)]

        # Wavefront over (time, layer): at step s, layer l handles t = s - l.
        # Layers are processed in DECREASING l so layer l reads h[l-1] from the
        # previous wavefront step before layer l-1 overwrites it.  The per-step
        # dots of different layers are mutually independent, so the scheduler /
        # MXU pipeline overlaps them; the serial chain is T + L - 1 steps.
        # TODO(synk): for very long sequences (T ~ 1000) switch the unrolled
        # Python loop to a lax.fori_loop over wavefront steps to bound compile
        # time / live ranges.
        for s in range(T + num_layers - 1):
            for l in range(num_layers - 1, -1, -1):
                t = s - l
                if not (0 <= t < T):
                    continue
                if l == 0:
                    pre = xproj0[t * B:(t + 1) * B, :] + jnp.dot(
                        h[0].astype(jnp.bfloat16), whh[0],
                        preferred_element_type=jnp.float32)              # (B, H)
                else:
                    pre = (jnp.dot(h[l - 1].astype(jnp.bfloat16), wih[l],
                                   preferred_element_type=jnp.float32)
                           + jnp.dot(h[l].astype(jnp.bfloat16), whh[l],
                                     preferred_element_type=jnp.float32)
                           + b_full[l])                                  # (B, H)
                h[l] = jnp.tanh(pre)

        # FC head on the last layer's final hidden state (== out[:, -1, :]);
        # only this tiny (B, n_classes) result is stored back to HBM.
        out_ref[...] = (jnp.dot(h[num_layers - 1], wfc_ref[...],
                                preferred_element_type=jnp.float32)
                        + bfc_ref[...])

    return kernel


_VMEM = pl.BlockSpec(memory_space=pltpu.MemorySpace.VMEM)


def rnn_forward(x, params):
    """x: (B, C=input_size, T), matching the PyTorch module's input layout."""
    B, C, T = x.shape
    L = len(params["w_ih"])
    H = params["w_hh"][0].shape[0]
    n_classes = params["w_fc"].shape[1]

    # x.permute(0,2,1) -> (B, T, C); go straight to time-major rows (T*B, C) so
    # the kernel can do one bulk input projection and static row slices.
    x2d = jnp.transpose(x, (2, 0, 1)).reshape(T * B, C)

    flat_weights = []
    for l in range(L):
        flat_weights += [params["w_ih"][l].astype(jnp.bfloat16),
                         params["w_hh"][l].astype(jnp.bfloat16),
                         params["b"][l]]

    # The whole problem (<100 KiB at these sizes) is VMEM-resident; whole-array
    # BlockSpecs, no grid, no scratch.
    return pl.pallas_call(
        _make_rnn_kernel(L, T, B, H),
        out_shape=jax.ShapeDtypeStruct((B, n_classes), jnp.float32),
        in_specs=[_VMEM] * (1 + 3 * L + 2),
        out_specs=_VMEM,
    )(x2d, *flat_weights, params["w_fc"], params["b_fc"])


rnn_forward_jit = jax.jit(rnn_forward)


# --------------------------------------------------------------------------
# Deterministic parameter init (shapes follow nn.RNN / nn.Linear of the module)
# --------------------------------------------------------------------------
def init_params(key, input_size=22, hidden=64, num_layers=2, n_classes=4):
    stdv = 1.0 / (hidden ** 0.5)
    w_ih, w_hh, b = [], [], []
    for l in range(num_layers):
        in_size = input_size if l == 0 else hidden
        key, k1, k2, k3, k4 = jax.random.split(key, 5)
        w_ih.append(jax.random.uniform(k1, (in_size, hidden), jnp.float32, -stdv, stdv))
        w_hh.append(jax.random.uniform(k2, (hidden, hidden), jnp.float32, -stdv, stdv))
        b_ih = jax.random.uniform(k3, (hidden,), jnp.float32, -stdv, stdv)
        b_hh = jax.random.uniform(k4, (hidden,), jnp.float32, -stdv, stdv)
        b.append((b_ih + b_hh)[None, :])
    key, k5, k6 = jax.random.split(key, 3)
    w_fc = jax.random.uniform(k5, (hidden, n_classes), jnp.float32, -stdv, stdv)
    b_fc = jax.random.uniform(k6, (1, n_classes), jnp.float32, -stdv, stdv)
    return {"w_ih": w_ih, "w_hh": w_hh, "b": b, "w_fc": w_fc, "b_fc": b_fc}


# --------------------------------------------------------------------------
# Pure-JAX reference (identical math incl. bf16 matmul operands) for checking
# --------------------------------------------------------------------------
def ref_forward(x, params):
    B, C, T = x.shape
    L = len(params["w_ih"])
    H = params["w_hh"][0].shape[0]
    inp = jnp.transpose(x, (2, 0, 1))  # (T, B, C) time-major

    for l in range(L):
        wih = params["w_ih"][l].astype(jnp.bfloat16)
        whh = params["w_hh"][l].astype(jnp.bfloat16)
        b = params["b"][l]

        def step(h, x_t, wih=wih, whh=whh, b=b):
            pre = (jnp.dot(x_t.astype(jnp.bfloat16), wih,
                           preferred_element_type=jnp.float32)
                   + jnp.dot(h.astype(jnp.bfloat16), whh,
                             preferred_element_type=jnp.float32)
                   + b)
            h = jnp.tanh(pre)
            return h, h

        h0 = jnp.zeros((B, H), jnp.float32)
        _, hs = lax.scan(step, h0, inp)
        inp = hs                                   # (T, B, H)

    last = inp[-1]                                 # (B, H) == out[:, -1, :]
    return jnp.dot(last, params["w_fc"],
                   preferred_element_type=jnp.float32) + params["b_fc"]


# --------------------------------------------------------------------------
if __name__ == "__main__":
    B, C, T = 2, 22, 16            # small shapes; C = input_size of the module
    HIDDEN, LAYERS, N_CLASSES = 64, 2, 4

    key = jax.random.PRNGKey(0)
    key, xk = jax.random.split(key)
    x = jax.random.normal(xk, (B, C, T), jnp.float32)

    params = init_params(key, input_size=C, hidden=HIDDEN,
                         num_layers=LAYERS, n_classes=N_CLASSES)

    out = jax.block_until_ready(rnn_forward_jit(x, params))
    assert out.shape == (B, N_CLASSES)

    ref = jax.block_until_ready(ref_forward(x, params))
    assert jnp.allclose(out, ref, atol=2e-3, rtol=2e-3), (out, ref)

    print("KERNEL_OK")
</pallas_src>

<mosaic_0001>
module attributes {stable_mosaic.version = 11 : i64} {
  func.func @kernel(%arg0: memref<32x22xf32, #tpu.memory_space<vmem>>, %arg1: memref<22x64xbf16, #tpu.memory_space<vmem>>, %arg2: memref<64x64xbf16, #tpu.memory_space<vmem>>, %arg3: memref<1x64xf32, #tpu.memory_space<vmem>>, %arg4: memref<64x64xbf16, #tpu.memory_space<vmem>>, %arg5: memref<64x64xbf16, #tpu.memory_space<vmem>>, %arg6: memref<1x64xf32, #tpu.memory_space<vmem>>, %arg7: memref<64x4xf32, #tpu.memory_space<vmem>>, %arg8: memref<1x4xf32, #tpu.memory_space<vmem>>, %arg9: memref<2x4xf32, #tpu.memory_space<vmem>>) attributes {dimension_semantics = [], scalar_prefetch = 0 : i64, scratch_operands = 0 : i64, tpu.core_type = #tpu.core_type<tc>} {
    %c0 = arith.constant 0 : index
    %c0_0 = arith.constant 0 : index
    %0 = vector.load %arg1[%c0, %c0_0] : memref<22x64xbf16, #tpu.memory_space<vmem>>, vector<22x64xbf16>
    %c0_1 = arith.constant 0 : index
    %c0_2 = arith.constant 0 : index
    %1 = vector.load %arg4[%c0_1, %c0_2] : memref<64x64xbf16, #tpu.memory_space<vmem>>, vector<64x64xbf16>
    %c0_3 = arith.constant 0 : index
    %c0_4 = arith.constant 0 : index
    %2 = vector.load %arg2[%c0_3, %c0_4] : memref<64x64xbf16, #tpu.memory_space<vmem>>, vector<64x64xbf16>
    %c0_5 = arith.constant 0 : index
    %c0_6 = arith.constant 0 : index
    %3 = vector.load %arg5[%c0_5, %c0_6] : memref<64x64xbf16, #tpu.memory_space<vmem>>, vector<64x64xbf16>
    %c0_7 = arith.constant 0 : index
    %c0_8 = arith.constant 0 : index
    %4 = vector.load %arg3[%c0_7, %c0_8] : memref<1x64xf32, #tpu.memory_space<vmem>>, vector<1x64xf32>
    %c0_9 = arith.constant 0 : index
    %c0_10 = arith.constant 0 : index
    %5 = vector.load %arg6[%c0_9, %c0_10] : memref<1x64xf32, #tpu.memory_space<vmem>>, vector<1x64xf32>
    %6 = vector.shape_cast %5 : vector<1x64xf32> to vector<1x64xf32>
    %7 = vector.broadcast %6 : vector<1x64xf32> to vector<2x64xf32>
    %c0_11 = arith.constant 0 : index
    %c0_12 = arith.constant 0 : index
    %8 = vector.load %arg0[%c0_11, %c0_12] : memref<32x22xf32, #tpu.memory_space<vmem>>, vector<32x22xf32>
    %9 = arith.truncf %8 : vector<32x22xf32> to vector<32x22xbf16>
    %cst = arith.constant dense<0.000000e+00> : vector<32x64xf32>
    %10 = tpu.matmul %9, %0, %cst {dimension_numbers = #tpu.dot_dimension_numbers<[1], [0], [0], [1], [0, 0, 1, 1], [], []>} : vector<32x22xbf16>, vector<22x64xbf16>, vector<32x64xf32> -> vector<32x64xf32>
    %11 = vector.broadcast %4 : vector<1x64xf32> to vector<32x64xf32>
    %12 = arith.addf %10, %11 : vector<32x64xf32>
    %cst_13 = arith.constant 0.000000e+00 : f32
    %13 = vector.broadcast %cst_13 : f32 to vector<2x64xf32>
    %cst_14 = arith.constant 0.000000e+00 : f32
    %14 = vector.broadcast %cst_14 : f32 to vector<2x64xf32>
    %15 = vector.extract_strided_slice %12 {offsets = [0, 0], sizes = [2, 64], strides = [1, 1]} : vector<32x64xf32> to vector<2x64xf32>
    %16 = arith.truncf %13 : vector<2x64xf32> to vector<2x64xbf16>
    %cst_15 = arith.constant dense<0.000000e+00> : vector<2x64xf32>
    %17 = tpu.matmul %16, %2, %cst_15 {dimension_numbers = #tpu.dot_dimension_numbers<[1], [0], [0], [1], [0, 0, 1, 1], [], []>} : vector<2x64xbf16>, vector<64x64xbf16>, vector<2x64xf32> -> vector<2x64xf32>
    %18 = arith.addf %15, %17 : vector<2x64xf32>
    %19 = math.tanh %18 : vector<2x64xf32>
    %20 = arith.truncf %19 : vector<2x64xf32> to vector<2x64xbf16>
    %cst_16 = arith.constant dense<0.000000e+00> : vector<2x64xf32>
    %21 = tpu.matmul %20, %1, %cst_16 {dimension_numbers = #tpu.dot_dimension_numbers<[1], [0], [0], [1], [0, 0, 1, 1], [], []>} : vector<2x64xbf16>, vector<64x64xbf16>, vector<2x64xf32> -> vector<2x64xf32>
    %22 = arith.truncf %14 : vector<2x64xf32> to vector<2x64xbf16>
    %cst_17 = arith.constant dense<0.000000e+00> : vector<2x64xf32>
    %23 = tpu.matmul %22, %3, %cst_17 {dimension_numbers = #tpu.dot_dimension_numbers<[1], [0], [0], [1], [0, 0, 1, 1], [], []>} : vector<2x64xbf16>, vector<64x64xbf16>, vector<2x64xf32> -> vector<2x64xf32>
    %24 = arith.addf %21, %23 : vector<2x64xf32>
    %25 = arith.addf %24, %7 : vector<2x64xf32>
    %26 = math.tanh %25 : vector<2x64xf32>
    %27 = vector.extract_strided_slice %12 {offsets = [2, 0], sizes = [2, 64], strides = [1, 1]} : vector<32x64xf32> to vector<2x64xf32>
    %28 = arith.truncf %19 : vector<2x64xf32> to vector<2x64xbf16>
    %cst_18 = arith.constant dense<0.000000e+00> : vector<2x64xf32>
    %29 = tpu.matmul %28, %2, %cst_18 {dimension_numbers = #tpu.dot_dimension_numbers<[1], [0], [0], [1], [0, 0, 1, 1], [], []>} : vector<2x64xbf16>, vector<64x64xbf16>, vector<2x64xf32> -> vector<2x64xf32>
    %30 = arith.addf %27, %29 : vector<2x64xf32>
    %31 = math.tanh %30 : vector<2x64xf32>
    %32 = arith.truncf %31 : vector<2x64xf32> to vector<2x64xbf16>
    %cst_19 = arith.constant dense<0.000000e+00> : vector<2x64xf32>
    %33 = tpu.matmul %32, %1, %cst_19 {dimension_numbers = #tpu.dot_dimension_numbers<[1], [0], [0], [1], [0, 0, 1, 1], [], []>} : vector<2x64xbf16>, vector<64x64xbf16>, vector<2x64xf32> -> vector<2x64xf32>
    %34 = arith.truncf %26 : vector<2x64xf32> to vector<2x64xbf16>
    %cst_20 = arith.constant dense<0.000000e+00> : vector<2x64xf32>
    %35 = tpu.matmul %34, %3, %cst_20 {dimension_numbers = #tpu.dot_dimension_numbers<[1], [0], [0], [1], [0, 0, 1, 1], [], []>} : vector<2x64xbf16>, vector<64x64xbf16>, vector<2x64xf32> -> vector<2x64xf32>
    %36 = arith.addf %33, %35 : vector<2x64xf32>
    %37 = arith.addf %36, %7 : vector<2x64xf32>
    %38 = math.tanh %37 : vector<2x64xf32>
    %39 = vector.extract_strided_slice %12 {offsets = [4, 0], sizes = [2, 64], strides = [1, 1]} : vector<32x64xf32> to vector<2x64xf32>
    %40 = arith.truncf %31 : vector<2x64xf32> to vector<2x64xbf16>
    %cst_21 = arith.constant dense<0.000000e+00> : vector<2x64xf32>
    %41 = tpu.matmul %40, %2, %cst_21 {dimension_numbers = #tpu.dot_dimension_numbers<[1], [0], [0], [1], [0, 0, 1, 1], [], []>} : vector<2x64xbf16>, vector<64x64xbf16>, vector<2x64xf32> -> vector<2x64xf32>
    %42 = arith.addf %39, %41 : vector<2x64xf32>
    %43 = math.tanh %42 : vector<2x64xf32>
    %44 = arith.truncf %43 : vector<2x64xf32> to vector<2x64xbf16>
    %cst_22 = arith.constant dense<0.000000e+00> : vector<2x64xf32>
    %45 = tpu.matmul %44, %1, %cst_22 {dimension_numbers = #tpu.dot_dimension_numbers<[1], [0], [0], [1], [0, 0, 1, 1], [], []>} : vector<2x64xbf16>, vector<64x64xbf16>, vector<2x64xf32> -> vector<2x64xf32>
    %46 = arith.truncf %38 : vector<2x64xf32> to vector<2x64xbf16>
    %cst_23 = arith.constant dense<0.000000e+00> : vector<2x64xf32>
    %47 = tpu.matmul %46, %3, %cst_23 {dimension_numbers = #tpu.dot_dimension_numbers<[1], [0], [0], [1], [0, 0, 1, 1], [], []>} : vector<2x64xbf16>, vector<64x64xbf16>, vector<2x64xf32> -> vector<2x64xf32>
    %48 = arith.addf %45, %47 : vector<2x64xf32>
    %49 = arith.addf %48, %7 : vector<2x64xf32>
    %50 = math.tanh %49 : vector<2x64xf32>
    %51 = vector.extract_strided_slice %12 {offsets = [6, 0], sizes = [2, 64], strides = [1, 1]} : vector<32x64xf32> to vector<2x64xf32>
    %52 = arith.truncf %43 : vector<2x64xf32> to vector<2x64xbf16>
    %cst_24 = arith.constant dense<0.000000e+00> : vector<2x64xf32>
    %53 = tpu.matmul %52, %2, %cst_24 {dimension_numbers = #tpu.dot_dimension_numbers<[1], [0], [0], [1], [0, 0, 1, 1], [], []>} : vector<2x64xbf16>, vector<64x64xbf16>, vector<2x64xf32> -> vector<2x64xf32>
    %54 = arith.addf %51, %53 : vector<2x64xf32>
    %55 = math.tanh %54 : vector<2x64xf32>
    %56 = arith.truncf %55 : vector<2x64xf32> to vector<2x64xbf16>
    %cst_25 = arith.constant dense<0.000000e+00> : vector<2x64xf32>
    %57 = tpu.matmul %56, %1, %cst_25 {dimension_numbers = #tpu.dot_dimension_numbers<[1], [0], [0], [1], [0, 0, 1, 1], [], []>} : vector<2x64xbf16>, vector<64x64xbf16>, vector<2x64xf32> -> vector<2x64xf32>
    %58 = arith.truncf %50 : vector<2x64xf32> to vector<2x64xbf16>
    %cst_26 = arith.constant dense<0.000000e+00> : vector<2x64xf32>
    %59 = tpu.matmul %58, %3, %cst_26 {dimension_numbers = #tpu.dot_dimension_numbers<[1], [0], [0], [1], [0, 0, 1, 1], [], []>} : vector<2x64xbf16>, vector<64x64xbf16>, vector<2x64xf32> -> vector<2x64xf32>
    %60 = arith.addf %57, %59 : vector<2x64xf32>
    %61 = arith.addf %60, %7 : vector<2x64xf32>
    %62 = math.tanh %61 : vector<2x64xf32>
    %63 = vector.extract_strided_slice %12 {offsets = [8, 0], sizes = [2, 64], strides = [1, 1]} : vector<32x64xf32> to vector<2x64xf32>
    %64 = arith.truncf %55 : vector<2x64xf32> to vector<2x64xbf16>
    %cst_27 = arith.constant dense<0.000000e+00> : vector<2x64xf32>
    %65 = tpu.matmul %64, %2, %cst_27 {dimension_numbers = #tpu.dot_dimension_numbers<[1], [0], [0], [1], [0, 0, 1, 1], [], []>} : vector<2x64xbf16>, vector<64x64xbf16>, vector<2x64xf32> -> vector<2x64xf32>
    %66 = arith.addf %63, %65 : vector<2x64xf32>
    %67 = math.tanh %66 : vector<2x64xf32>
    %68 = arith.truncf %67 : vector<2x64xf32> to vector<2x64xbf16>
    %cst_28 = arith.constant dense<0.000000e+00> : vector<2x64xf32>
    %69 = tpu.matmul %68, %1, %cst_28 {dimension_numbers = #tpu.dot_dimension_numbers<[1], [0], [0], [1], [0, 0, 1, 1], [], []>} : vector<2x64xbf16>, vector<64x64xbf16>, vector<2x64xf32> -> vector<2x64xf32>
    %70 = arith.truncf %62 : vector<2x64xf32> to vector<2x64xbf16>
    %cst_29 = arith.constant dense<0.000000e+00> : vector<2x64xf32>
    %71 = tpu.matmul %70, %3, %cst_29 {dimension_numbers = #tpu.dot_dimension_numbers<[1], [0], [0], [1], [0, 0, 1, 1], [], []>} : vector<2x64xbf16>, vector<64x64xbf16>, vector<2x64xf32> -> vector<2x64xf32>
    %72 = arith.addf %69, %71 : vector<2x64xf32>
    %73 = arith.addf %72, %7 : vector<2x64xf32>
    %74 = math.tanh %73 : vector<2x64xf32>
    %75 = vector.extract_strided_slice %12 {offsets = [10, 0], sizes = [2, 64], strides = [1, 1]} : vector<32x64xf32> to vector<2x64xf32>
    %76 = arith.truncf %67 : vector<2x64xf32> to vector<2x64xbf16>
    %cst_30 = arith.constant dense<0.000000e+00> : vector<2x64xf32>
    %77 = tpu.matmul %76, %2, %cst_30 {dimension_numbers = #tpu.dot_dimension_numbers<[1], [0], [0], [1], [0, 0, 1, 1], [], []>} : vector<2x64xbf16>, vector<64x64xbf16>, vector<2x64xf32> -> vector<2x64xf32>
    %78 = arith.addf %75, %77 : vector<2x64xf32>
    %79 = math.tanh %78 : vector<2x64xf32>
    %80 = arith.truncf %79 : vector<2x64xf32> to vector<2x64xbf16>
    %cst_31 = arith.constant dense<0.000000e+00> : vector<2x64xf32>
    %81 = tpu.matmul %80, %1, %cst_31 {dimension_numbers = #tpu.dot_dimension_numbers<[1], [0], [0], [1], [0, 0, 1, 1], [], []>} : vector<2x64xbf16>, vector<64x64xbf16>, vector<2x64xf32> -> vector<2x64xf32>
    %82 = arith.truncf %74 : vector<2x64xf32> to vector<2x64xbf16>
    %cst_32 = arith.constant dense<0.000000e+00> : vector<2x64xf32>
    %83 = tpu.matmul %82, %3, %cst_32 {dimension_numbers = #tpu.dot_dimension_numbers<[1], [0], [0], [1], [0, 0, 1, 1], [], []>} : vector<2x64xbf16>, vector<64x64xbf16>, vector<2x64xf32> -> vector<2x64xf32>
    %84 = arith.addf %81, %83 : vector<2x64xf32>
    %85 = arith.addf %84, %7 : vector<2x64xf32>
    %86 = math.tanh %85 : vector<2x64xf32>
    %87 = vector.extract_strided_slice %12 {offsets = [12, 0], sizes = [2, 64], strides = [1, 1]} : vector<32x64xf32> to vector<2x64xf32>
    %88 = arith.truncf %79 : vector<2x64xf32> to vector<2x64xbf16>
    %cst_33 = arith.constant dense<0.000000e+00> : vector<2x64xf32>
    %89 = tpu.matmul %88, %2, %cst_33 {dimension_numbers = #tpu.dot_dimension_numbers<[1], [0], [0], [1], [0, 0, 1, 1], [], []>} : vector<2x64xbf16>, vector<64x64xbf16>, vector<2x64xf32> -> vector<2x64xf32>
    %90 = arith.addf %87, %89 : vector<2x64xf32>
    %91 = math.tanh %90 : vector<2x64xf32>
    %92 = arith.truncf %91 : vector<2x64xf32> to vector<2x64xbf16>
    %cst_34 = arith.constant dense<0.000000e+00> : vector<2x64xf32>
    %93 = tpu.matmul %92, %1, %cst_34 {dimension_numbers = #tpu.dot_dimension_numbers<[1], [0], [0], [1], [0, 0, 1, 1], [], []>} : vector<2x64xbf16>, vector<64x64xbf16>, vector<2x64xf32> -> vector<2x64xf32>
    %94 = arith.truncf %86 : vector<2x64xf32> to vector<2x64xbf16>
    %cst_35 = arith.constant dense<0.000000e+00> : vector<2x64xf32>
    %95 = tpu.matmul %94, %3, %cst_35 {dimension_numbers = #tpu.dot_dimension_numbers<[1], [0], [0], [1], [0, 0, 1, 1], [], []>} : vector<2x64xbf16>, vector<64x64xbf16>, vector<2x64xf32> -> vector<2x64xf32>
    %96 = arith.addf %93, %95 : vector<2x64xf32>
    %97 = arith.addf %96, %7 : vector<2x64xf32>
    %98 = math.tanh %97 : vector<2x64xf32>
    %99 = vector.extract_strided_slice %12 {offsets = [14, 0], sizes = [2, 64], strides = [1, 1]} : vector<32x64xf32> to vector<2x64xf32>
    %100 = arith.truncf %91 : vector<2x64xf32> to vector<2x64xbf16>
    %cst_36 = arith.constant dense<0.000000e+00> : vector<2x64xf32>
    %101 = tpu.matmul %100, %2, %cst_36 {dimension_numbers = #tpu.dot_dimension_numbers<[1], [0], [0], [1], [0, 0, 1, 1], [], []>} : vector<2x64xbf16>, vector<64x64xbf16>, vector<2x64xf32> -> vector<2x64xf32>
    %102 = arith.addf %99, %101 : vector<2x64xf32>
    %103 = math.tanh %102 : vector<2x64xf32>
    %104 = arith.truncf %103 : vector<2x64xf32> to vector<2x64xbf16>
    %cst_37 = arith.constant dense<0.000000e+00> : vector<2x64xf32>
    %105 = tpu.matmul %104, %1, %cst_37 {dimension_numbers = #tpu.dot_dimension_numbers<[1], [0], [0], [1], [0, 0, 1, 1], [], []>} : vector<2x64xbf16>, vector<64x64xbf16>, vector<2x64xf32> -> vector<2x64xf32>
    %106 = arith.truncf %98 : vector<2x64xf32> to vector<2x64xbf16>
    %cst_38 = arith.constant dense<0.000000e+00> : vector<2x64xf32>
    %107 = tpu.matmul %106, %3, %cst_38 {dimension_numbers = #tpu.dot_dimension_numbers<[1], [0], [0], [1], [0, 0, 1, 1], [], []>} : vector<2x64xbf16>, vector<64x64xbf16>, vector<2x64xf32> -> vector<2x64xf32>
    %108 = arith.addf %105, %107 : vector<2x64xf32>
    %109 = arith.addf %108, %7 : vector<2x64xf32>
    %110 = math.tanh %109 : vector<2x64xf32>
    %111 = vector.extract_strided_slice %12 {offsets = [16, 0], sizes = [2, 64], strides = [1, 1]} : vector<32x64xf32> to vector<2x64xf32>
    %112 = arith.truncf %103 : vector<2x64xf32> to vector<2x64xbf16>
    %cst_39 = arith.constant dense<0.000000e+00> : vector<2x64xf32>
    %113 = tpu.matmul %112, %2, %cst_39 {dimension_numbers = #tpu.dot_dimension_numbers<[1], [0], [0], [1], [0, 0, 1, 1], [], []>} : vector<2x64xbf16>, vector<64x64xbf16>, vector<2x64xf32> -> vector<2x64xf32>
    %114 = arith.addf %111, %113 : vector<2x64xf32>
    %115 = math.tanh %114 : vector<2x64xf32>
    %116 = arith.truncf %115 : vector<2x64xf32> to vector<2x64xbf16>
    %cst_40 = arith.constant dense<0.000000e+00> : vector<2x64xf32>
    %117 = tpu.matmul %116, %1, %cst_40 {dimension_numbers = #tpu.dot_dimension_numbers<[1], [0], [0], [1], [0, 0, 1, 1], [], []>} : vector<2x64xbf16>, vector<64x64xbf16>, vector<2x64xf32> -> vector<2x64xf32>
    %118 = arith.truncf %110 : vector<2x64xf32> to vector<2x64xbf16>
    %cst_41 = arith.constant dense<0.000000e+00> : vector<2x64xf32>
    %119 = tpu.matmul %118, %3, %cst_41 {dimension_numbers = #tpu.dot_dimension_numbers<[1], [0], [0], [1], [0, 0, 1, 1], [], []>} : vector<2x64xbf16>, vector<64x64xbf16>, vector<2x64xf32> -> vector<2x64xf32>
    %120 = arith.addf %117, %119 : vector<2x64xf32>
    %121 = arith.addf %120, %7 : vector<2x64xf32>
    %122 = math.tanh %121 : vector<2x64xf32>
    %123 = vector.extract_strided_slice %12 {offsets = [18, 0], sizes = [2, 64], strides = [1, 1]} : vector<32x64xf32> to vector<2x64xf32>
    %124 = arith.truncf %115 : vector<2x64xf32> to vector<2x64xbf16>
    %cst_42 = arith.constant dense<0.000000e+00> : vector<2x64xf32>
    %125 = tpu.matmul %124, %2, %cst_42 {dimension_numbers = #tpu.dot_dimension_numbers<[1], [0], [0], [1], [0, 0, 1, 1], [], []>} : vector<2x64xbf16>, vector<64x64xbf16>, vector<2x64xf32> -> vector<2x64xf32>
    %126 = arith.addf %123, %125 : vector<2x64xf32>
    %127 = math.tanh %126 : vector<2x64xf32>
    %128 = arith.truncf %127 : vector<2x64xf32> to vector<2x64xbf16>
    %cst_43 = arith.constant dense<0.000000e+00> : vector<2x64xf32>
    %129 = tpu.matmul %128, %1, %cst_43 {dimension_numbers = #tpu.dot_dimension_numbers<[1], [0], [0], [1], [0, 0, 1, 1], [], []>} : vector<2x64xbf16>, vector<64x64xbf16>, vector<2x64xf32> -> vector<2x64xf32>
    %130 = arith.truncf %122 : vector<2x64xf32> to vector<2x64xbf16>
    %cst_44 = arith.constant dense<0.000000e+00> : vector<2x64xf32>
    %131 = tpu.matmul %130, %3, %cst_44 {dimension_numbers = #tpu.dot_dimension_numbers<[1], [0], [0], [1], [0, 0, 1, 1], [], []>} : vector<2x64xbf16>, vector<64x64xbf16>, vector<2x64xf32> -> vector<2x64xf32>
    %132 = arith.addf %129, %131 : vector<2x64xf32>
    %133 = arith.addf %132, %7 : vector<2x64xf32>
    %134 = math.tanh %133 : vector<2x64xf32>
    %135 = vector.extract_strided_slice %12 {offsets = [20, 0], sizes = [2, 64], strides = [1, 1]} : vector<32x64xf32> to vector<2x64xf32>
    %136 = arith.truncf %127 : vector<2x64xf32> to vector<2x64xbf16>
    %cst_45 = arith.constant dense<0.000000e+00> : vector<2x64xf32>
    %137 = tpu.matmul %136, %2, %cst_45 {dimension_numbers = #tpu.dot_dimension_numbers<[1], [0], [0], [1], [0, 0, 1, 1], [], []>} : vector<2x64xbf16>, vector<64x64xbf16>, vector<2x64xf32> -> vector<2x64xf32>
    %138 = arith.addf %135, %137 : vector<2x64xf32>
    %139 = math.tanh %138 : vector<2x64xf32>
    %140 = arith.truncf %139 : vector<2x64xf32> to vector<2x64xbf16>
    %cst_46 = arith.constant dense<0.000000e+00> : vector<2x64xf32>
    %141 = tpu.matmul %140, %1, %cst_46 {dimension_numbers = #tpu.dot_dimension_numbers<[1], [0], [0], [1], [0, 0, 1, 1], [], []>} : vector<2x64xbf16>, vector<64x64xbf16>, vector<2x64xf32> -> vector<2x64xf32>
    %142 = arith.truncf %134 : vector<2x64xf32> to vector<2x64xbf16>
    %cst_47 = arith.constant dense<0.000000e+00> : vector<2x64xf32>
    %143 = tpu.matmul %142, %3, %cst_47 {dimension_numbers = #tpu.dot_dimension_numbers<[1], [0], [0], [1], [0, 0, 1, 1], [], []>} : vector<2x64xbf16>, vector<64x64xbf16>, vector<2x64xf32> -> vector<2x64xf32>
    %144 = arith.addf %141, %143 : vector<2x64xf32>
    %145 = arith.addf %144, %7 : vector<2x64xf32>
    %146 = math.tanh %145 : vector<2x64xf32>
    %147 = vector.extract_strided_slice %12 {offsets = [22, 0], sizes = [2, 64], strides = [1, 1]} : vector<32x64xf32> to vector<2x64xf32>
    %148 = arith.truncf %139 : vector<2x64xf32> to vector<2x64xbf16>
    %cst_48 = arith.constant dense<0.000000e+00> : vector<2x64xf32>
    %149 = tpu.matmul %148, %2, %cst_48 {dimension_numbers = #tpu.dot_dimension_numbers<[1], [0], [0], [1], [0, 0, 1, 1], [], []>} : vector<2x64xbf16>, vector<64x64xbf16>, vector<2x64xf32> -> vector<2x64xf32>
    %150 = arith.addf %147, %149 : vector<2x64xf32>
    %151 = math.tanh %150 : vector<2x64xf32>
    %152 = arith.truncf %151 : vector<2x64xf32> to vector<2x64xbf16>
    %cst_49 = arith.constant dense<0.000000e+00> : vector<2x64xf32>
    %153 = tpu.matmul %152, %1, %cst_49 {dimension_numbers = #tpu.dot_dimension_numbers<[1], [0], [0], [1], [0, 0, 1, 1], [], []>} : vector<2x64xbf16>, vector<64x64xbf16>, vector<2x64xf32> -> vector<2x64xf32>
    %154 = arith.truncf %146 : vector<2x64xf32> to vector<2x64xbf16>
    %cst_50 = arith.constant dense<0.000000e+00> : vector<2x64xf32>
    %155 = tpu.matmul %154, %3, %cst_50 {dimension_numbers = #tpu.dot_dimension_numbers<[1], [0], [0], [1], [0, 0, 1, 1], [], []>} : vector<2x64xbf16>, vector<64x64xbf16>, vector<2x64xf32> -> vector<2x64xf32>
    %156 = arith.addf %153, %155 : vector<2x64xf32>
    %157 = arith.addf %156, %7 : vector<2x64xf32>
    %158 = math.tanh %157 : vector<2x64xf32>
    %159 = vector.extract_strided_slice %12 {offsets = [24, 0], sizes = [2, 64], strides = [1, 1]} : vector<32x64xf32> to vector<2x64xf32>
    %160 = arith.truncf %151 : vector<2x64xf32> to vector<2x64xbf16>
    %cst_51 = arith.constant dense<0.000000e+00> : vector<2x64xf32>
    %161 = tpu.matmul %160, %2, %cst_51 {dimension_numbers = #tpu.dot_dimension_numbers<[1], [0], [0], [1], [0, 0, 1, 1], [], []>} : vector<2x64xbf16>, vector<64x64xbf16>, vector<2x64xf32> -> vector<2x64xf32>
    %162 = arith.addf %159, %161 : vector<2x64xf32>
    %163 = math.tanh %162 : vector<2x64xf32>
    %164 = arith.truncf %163 : vector<2x64xf32> to vector<2x64xbf16>
    %cst_52 = arith.constant dense<0.000000e+00> : vector<2x64xf32>
    %165 = tpu.matmul %164, %1, %cst_52 {dimension_numbers = #tpu.dot_dimension_numbers<[1], [0], [0], [1], [0, 0, 1, 1], [], []>} : vector<2x64xbf16>, vector<64x64xbf16>, vector<2x64xf32> -> vector<2x64xf32>
    %166 = arith.truncf %158 : vector<2x64xf32> to vector<2x64xbf16>
    %cst_53 = arith.constant dense<0.000000e+00> : vector<2x64xf32>
    %167 = tpu.matmul %166, %3, %cst_53 {dimension_numbers = #tpu.dot_dimension_numbers<[1], [0], [0], [1], [0, 0, 1, 1], [], []>} : vector<2x64xbf16>, vector<64x64xbf16>, vector<2x64xf32> -> vector<2x64xf32>
    %168 = arith.addf %165, %167 : vector<2x64xf32>
    %169 = arith.addf %168, %7 : vector<2x64xf32>
    %170 = math.tanh %169 : vector<2x64xf32>
    %171 = vector.extract_strided_slice %12 {offsets = [26, 0], sizes = [2, 64], strides = [1, 1]} : vector<32x64xf32> to vector<2x64xf32>
    %172 = arith.truncf %163 : vector<2x64xf32> to vector<2x64xbf16>
    %cst_54 = arith.constant dense<0.000000e+00> : vector<2x64xf32>
    %173 = tpu.matmul %172, %2, %cst_54 {dimension_numbers = #tpu.dot_dimension_numbers<[1], [0], [0], [1], [0, 0, 1, 1], [], []>} : vector<2x64xbf16>, vector<64x64xbf16>, vector<2x64xf32> -> vector<2x64xf32>
    %174 = arith.addf %171, %173 : vector<2x64xf32>
    %175 = math.tanh %174 : vector<2x64xf32>
    %176 = arith.truncf %175 : vector<2x64xf32> to vector<2x64xbf16>
    %cst_55 = arith.constant dense<0.000000e+00> : vector<2x64xf32>
    %177 = tpu.matmul %176, %1, %cst_55 {dimension_numbers = #tpu.dot_dimension_numbers<[1], [0], [0], [1], [0, 0, 1, 1], [], []>} : vector<2x64xbf16>, vector<64x64xbf16>, vector<2x64xf32> -> vector<2x64xf32>
    %178 = arith.truncf %170 : vector<2x64xf32> to vector<2x64xbf16>
    %cst_56 = arith.constant dense<0.000000e+00> : vector<2x64xf32>
    %179 = tpu.matmul %178, %3, %cst_56 {dimension_numbers = #tpu.dot_dimension_numbers<[1], [0], [0], [1], [0, 0, 1, 1], [], []>} : vector<2x64xbf16>, vector<64x64xbf16>, vector<2x64xf32> -> vector<2x64xf32>
    %180 = arith.addf %177, %179 : vector<2x64xf32>
    %181 = arith.addf %180, %7 : vector<2x64xf32>
    %182 = math.tanh %181 : vector<2x64xf32>
    %183 = vector.extract_strided_slice %12 {offsets = [28, 0], sizes = [2, 64], strides = [1, 1]} : vector<32x64xf32> to vector<2x64xf32>
    %184 = arith.truncf %175 : vector<2x64xf32> to vector<2x64xbf16>
    %cst_57 = arith.constant dense<0.000000e+00> : vector<2x64xf32>
    %185 = tpu.matmul %184, %2, %cst_57 {dimension_numbers = #tpu.dot_dimension_numbers<[1], [0], [0], [1], [0, 0, 1, 1], [], []>} : vector<2x64xbf16>, vector<64x64xbf16>, vector<2x64xf32> -> vector<2x64xf32>
    %186 = arith.addf %183, %185 : vector<2x64xf32>
    %187 = math.tanh %186 : vector<2x64xf32>
    %188 = arith.truncf %187 : vector<2x64xf32> to vector<2x64xbf16>
    %cst_58 = arith.constant dense<0.000000e+00> : vector<2x64xf32>
    %189 = tpu.matmul %188, %1, %cst_58 {dimension_numbers = #tpu.dot_dimension_numbers<[1], [0], [0], [1], [0, 0, 1, 1], [], []>} : vector<2x64xbf16>, vector<64x64xbf16>, vector<2x64xf32> -> vector<2x64xf32>
    %190 = arith.truncf %182 : vector<2x64xf32> to vector<2x64xbf16>
    %cst_59 = arith.constant dense<0.000000e+00> : vector<2x64xf32>
    %191 = tpu.matmul %190, %3, %cst_59 {dimension_numbers = #tpu.dot_dimension_numbers<[1], [0], [0], [1], [0, 0, 1, 1], [], []>} : vector<2x64xbf16>, vector<64x64xbf16>, vector<2x64xf32> -> vector<2x64xf32>
    %192 = arith.addf %189, %191 : vector<2x64xf32>
    %193 = arith.addf %192, %7 : vector<2x64xf32>
    %194 = math.tanh %193 : vector<2x64xf32>
    %195 = vector.extract_strided_slice %12 {offsets = [30, 0], sizes = [2, 64], strides = [1, 1]} : vector<32x64xf32> to vector<2x64xf32>
    %196 = arith.truncf %187 : vector<2x64xf32> to vector<2x64xbf16>
    %cst_60 = arith.constant dense<0.000000e+00> : vector<2x64xf32>
    %197 = tpu.matmul %196, %2, %cst_60 {dimension_numbers = #tpu.dot_dimension_numbers<[1], [0], [0], [1], [0, 0, 1, 1], [], []>} : vector<2x64xbf16>, vector<64x64xbf16>, vector<2x64xf32> -> vector<2x64xf32>
    %198 = arith.addf %195, %197 : vector<2x64xf32>
    %199 = math.tanh %198 : vector<2x64xf32>
    %200 = arith.truncf %199 : vector<2x64xf32> to vector<2x64xbf16>
    %cst_61 = arith.constant dense<0.000000e+00> : vector<2x64xf32>
    %201 = tpu.matmul %200, %1, %cst_61 {dimension_numbers = #tpu.dot_dimension_numbers<[1], [0], [0], [1], [0, 0, 1, 1], [], []>} : vector<2x64xbf16>, vector<64x64xbf16>, vector<2x64xf32> -> vector<2x64xf32>
    %202 = arith.truncf %194 : vector<2x64xf32> to vector<2x64xbf16>
    %cst_62 = arith.constant dense<0.000000e+00> : vector<2x64xf32>
    %203 = tpu.matmul %202, %3, %cst_62 {dimension_numbers = #tpu.dot_dimension_numbers<[1], [0], [0], [1], [0, 0, 1, 1], [], []>} : vector<2x64xbf16>, vector<64x64xbf16>, vector<2x64xf32> -> vector<2x64xf32>
    %204 = arith.addf %201, %203 : vector<2x64xf32>
    %205 = arith.addf %204, %7 : vector<2x64xf32>
    %206 = math.tanh %205 : vector<2x64xf32>
    %c0_63 = arith.constant 0 : index
    %c0_64 = arith.constant 0 : index
    %207 = vector.load %arg7[%c0_63, %c0_64] : memref<64x4xf32, #tpu.memory_space<vmem>>, vector<64x4xf32>
    %cst_65 = arith.constant dense<0.000000e+00> : vector<2x4xf32>
    %208 = tpu.matmul %206, %207, %cst_65 {dimension_numbers = #tpu.dot_dimension_numbers<[1], [0], [0], [1], [0, 0, 1, 1], [], []>} : vector<2x64xf32>, vector<64x4xf32>, vector<2x4xf32> -> vector<2x4xf32>
    %c0_66 = arith.constant 0 : index
    %c0_67 = arith.constant 0 : index
    %209 = vector.load %arg8[%c0_66, %c0_67] : memref<1x4xf32, #tpu.memory_space<vmem>>, vector<1x4xf32>
    %210 = vector.broadcast %209 : vector<1x4xf32> to vector<2x4xf32>
    %211 = arith.addf %208, %210 : vector<2x4xf32>
    %c0_68 = arith.constant 0 : index
    %c0_69 = arith.constant 0 : index
    %212 = vector.load %arg9[%c0_68, %c0_69] : memref<2x4xf32, #tpu.memory_space<vmem>>, vector<2x4xf32>
    tpu.vector_store %arg9[%c0_68, %c0_69], %211 {strides = array<i32>} : memref<2x4xf32, #tpu.memory_space<vmem>>, vector<2x4xf32>,
    return
  }
}

</mosaic_0001>

<llo_original>
// kernel: rnn_forward.1
$region0: #{rnn_forward.1}
  #allocation0 [shape = 'u32[]', space=smem, size = 0x4, offset = 0x4, fixed_abs, tag = 'smem constant byte address 0x4 - core index']
  #allocation1 [shape = 'u32[144,128]{1,0:T(1,128)}', space=vmem, size = 0x12000, scoped, tag = 'internal scratch']
  %s0 = inlined_call_operand.vmem [shape: f32[32,22], index: 0, kind: input, shape index: {}]
  %s1 = inlined_call_operand.vmem [shape: bf16[22,64], index: 1, kind: input, shape index: {}]
  %s2 = inlined_call_operand.vmem [shape: bf16[64,64], index: 2, kind: input, shape index: {}]
  %s3 = inlined_call_operand.vmem [shape: f32[1,64], index: 3, kind: input, shape index: {}]
  %s4 = inlined_call_operand.vmem [shape: bf16[64,64], index: 4, kind: input, shape index: {}]
  %s5 = inlined_call_operand.vmem [shape: bf16[64,64], index: 5, kind: input, shape index: {}]
  %s6 = inlined_call_operand.vmem [shape: f32[1,64], index: 6, kind: input, shape index: {}]
  %s7 = inlined_call_operand.vmem [shape: f32[64,4], index: 7, kind: input, shape index: {}]
  %s8 = inlined_call_operand.vmem [shape: f32[1,4], index: 8, kind: input, shape index: {}]
  %s9 = inlined_call_operand.hbm [shape: f32[2,4], index: 9, kind: output, shape index: {}]
  %s10 = sld [smem:[#allocation0]]
  $region46: #{rnn_forward.1} parent=0
    _
  %s12 = ssub.s32 1, %s10
  %s13 = scalar_select 0, %s12, %s10
  $region1: #{rnn_forward.1} parent=0
    #allocation2 [shape = 'u8[1024]{0}', space=vmem, size = 0x400, scoped, tag = 'output window, operand 0, single buffered']
    #allocation3 [shape = 's32[1]{0}', space=sflag, size = 0x4, scoped, tag = 'scoped memory for rnn_forward.1']
    %14 = vsyncpa [#allocation3], 0
    // Predicated region
    $region2: #{rnn_forward.1} parent=1 // pred_check
      _
    $region3: #{rnn_forward.1} parent=1 // pred_check_branch
      %16 = sbr.rel (0) target = $region5
    $region4: #{rnn_forward.1} parent=1 // pred_region
      _
    $region5: #{rnn_forward.1} parent=1 // pred_fallthru
      _
    // Predicated region
    $region6: #{rnn_forward.1} parent=1 // pred_check
      _
    $region7: #{rnn_forward.1} parent=1 // pred_check_branch
      %18 = sbr.rel (0) target = $region9
    $region8: #{rnn_forward.1} parent=1 // pred_region
      _
    $region9: #{rnn_forward.1} parent=1 // pred_fallthru
      _
    // Predicated region
    $region10: #{rnn_forward.1} parent=1 // pred_check
      _
    $region11: #{rnn_forward.1} parent=1 // pred_check_branch
      %20 = sbr.rel (0) target = $region13
    $region12: #{rnn_forward.1} parent=1 // pred_region
      _
    $region13: #{rnn_forward.1} parent=1 // pred_fallthru
      _
    // Predicated region
    $region14: #{rnn_forward.1} parent=1 // pred_check
      _
    $region15: #{rnn_forward.1} parent=1 // pred_check_branch
      %22 = sbr.rel (0) target = $region17
    $region16: #{rnn_forward.1} parent=1 // pred_region
      _
    $region17: #{rnn_forward.1} parent=1 // pred_fallthru
      _
    // Predicated region
    $region18: #{rnn_forward.1} parent=1 // pred_check
      _
    $region19: #{rnn_forward.1} parent=1 // pred_check_branch
      %24 = sbr.rel (0) target = $region21
    $region20: #{rnn_forward.1} parent=1 // pred_region
      _
    $region21: #{rnn_forward.1} parent=1 // pred_fallthru
      _
    // Predicated region
    $region22: #{rnn_forward.1} parent=1 // pred_check
      _
    $region23: #{rnn_forward.1} parent=1 // pred_check_branch
      %26 = sbr.rel (0) target = $region25
    $region24: #{rnn_forward.1} parent=1 // pred_region
      _
    $region25: #{rnn_forward.1} parent=1 // pred_fallthru
      _
    // Predicated region
    $region26: #{rnn_forward.1} parent=1 // pred_check
      _
    $region27: #{rnn_forward.1} parent=1 // pred_check_branch
      %28 = sbr.rel (0) target = $region29
    $region28: #{rnn_forward.1} parent=1 // pred_region
      _
    $region29: #{rnn_forward.1} parent=1 // pred_fallthru
      _
    // Predicated region
    $region30: #{rnn_forward.1} parent=1 // pred_check
      _
    $region31: #{rnn_forward.1} parent=1 // pred_check_branch
      %30 = sbr.rel (0) target = $region33
    $region32: #{rnn_forward.1} parent=1 // pred_region
      _
    $region33: #{rnn_forward.1} parent=1 // pred_fallthru
      _
    // Predicated region
    $region34: #{rnn_forward.1} parent=1 // pred_check
      _
    $region35: #{rnn_forward.1} parent=1 // pred_check_branch
      %32 = sbr.rel (0) target = $region37
    $region36: #{rnn_forward.1} parent=1 // pred_region
      _
    $region37: #{rnn_forward.1} parent=1 // pred_fallthru
      _
    %v34 = vld [vmem:[%s1] sm:$0xf]
    %v35 = vld [vmem:[%s1 + $0x4] sm:$0xf]
    %v36 = vld [vmem:[%s1 + $0x8] sm:$0x7]
    %v37 = vld [vmem:[%s4] sm:$0xf]
    %v38 = vld [vmem:[%s4 + $0x4] sm:$0xf]
    %v39 = vld [vmem:[%s4 + $0x8] sm:$0xf]
    %v40 = vld [vmem:[%s4 + $0xc] sm:$0xf]
    %v41 = vld [vmem:[%s4 + $0x10] sm:$0xf]
    %v42 = vld [vmem:[%s4 + $0x14] sm:$0xf]
    %v43 = vld [vmem:[%s4 + $0x18] sm:$0xf]
    %v44 = vld [vmem:[%s4 + $0x1c] sm:$0xf]
    %v45 = vld [vmem:[%s2] sm:$0xf]
    %v46 = vld [vmem:[%s2 + $0x4] sm:$0xf]
    %v47 = vld [vmem:[%s2 + $0x8] sm:$0xf]
    %v48 = vld [vmem:[%s2 + $0xc] sm:$0xf]
    %v49 = vld [vmem:[%s2 + $0x10] sm:$0xf]
    %v50 = vld [vmem:[%s2 + $0x14] sm:$0xf]
    %v51 = vld [vmem:[%s2 + $0x18] sm:$0xf]
    %v52 = vld [vmem:[%s2 + $0x1c] sm:$0xf]
    %v53 = vld [vmem:[%s5] sm:$0xf]
    %v54 = vld [vmem:[%s5 + $0x4] sm:$0xf]
    %v55 = vld [vmem:[%s5 + $0x8] sm:$0xf]
    %v56 = vld [vmem:[%s5 + $0xc] sm:$0xf]
    %v57 = vld [vmem:[%s5 + $0x10] sm:$0xf]
    %v58 = vld [vmem:[%s5 + $0x14] sm:$0xf]
    %v59 = vld [vmem:[%s5 + $0x18] sm:$0xf]
    %v60 = vld [vmem:[%s5 + $0x1c] sm:$0xf]
    %v61 = vld [vmem:[%s3] sm:$0x1]
    %v62 = vld [vmem:[%s6] sm:$0x1]
    %v64 = vlaneseq
    %v65 = vshrl.u32 %v64, 7
    %v66 = vsub.s32 0, %v65
    %v67 = vrot.slane %v62, %v66
    %v69 = vld [vmem:[%s0] sm:$0xff]
    %v70 = vld [vmem:[%s0 + $0x8] sm:$0xff]
    %v71 = vld [vmem:[%s0 + $0x10] sm:$0xff]
    %v72 = vld [vmem:[%s0 + $0x18] sm:$0xff]
    %v73 = vpack.c.bf16 %v70, %v69
    %v74 = vpack.c.bf16 %v72, %v71
    %v76 = vlaneseq
    %v77 = vshrl.u32 %v76, 7
    %v78 = vsub.s32 0, %v77
    %v79 = vrot.slane %v61, %v78
    %v84 = vunpack.c.l.b16 %v34
    %v85 = vunpack.c.l.b16 %v35
    %v86 = vunpack.c.l.b16 %v36
    %v87 = vpack.c.b16 %v85, %v84
    %v88 = vpack.c.b16 %v86, %v86
    %vm90 = vcmask 179200
    %v92 = vsel %vm90, %v73, 0
    %v95 = vsel %vm90, %v74, 0
    %vm97 = vcmask 1042432
    %v99 = vsel %vm97, %v88, 0
    %101 = vmatprep.subr.bf16.mxu0 0
    %102 = vmatpush1.bf16.msra.mxu0 %v87
    %103 = vmatprep.subr.bf16.mxu0 0
    %104 = vmatpush1.bf16.msra.mxu0 %v99
    %105 = vmatprep.subr.bf16.mxu0 0
    %106 = vmatpush1.bf16.msra.mxu0 0
    %107 = vmatprep.subr.bf16.mxu0 0
    %108 = vmatpush1.bf16.msra.mxu0 0
    %109 = vmatprep.subr.bf16.mxu0 0
    %110 = vmatpush1.bf16.msra.mxu0 0
    %111 = vmatprep.subr.bf16.mxu0 0
    %112 = vmatpush1.bf16.msra.mxu0 0
    %113 = vmatprep.subr.bf16.mxu0 0
    %114 = vmatpush1.bf16.msra.mxu0 0
    %115 = vmatprep.subr.bf16.mxu0 0
    %116 = vmatpush1.bf16.msra.mxu0 0
    %117 = vmatprep.subr.bf16.mxu0 0
    %118 = vmatpush1.bf16.msra.mxu0 0
    %119 = vmatprep.subr.bf16.mxu0 0
    %120 = vmatpush1.bf16.msra.mxu0 0
    %121 = vmatprep.subr.bf16.mxu0 0
    %122 = vmatpush1.bf16.msra.mxu0 0
    %123 = vmatprep.subr.bf16.mxu0 0
    %124 = vmatpush1.bf16.msra.mxu0 0
    %125 = vmatprep.subr.bf16.mxu0 0
    %126 = vmatpush1.bf16.msra.mxu0 0
    %127 = vmatprep.subr.bf16.mxu0 0
    %128 = vmatpush1.bf16.msra.mxu0 0
    %129 = vmatprep.subr.bf16.mxu0 0
    %130 = vmatpush1.bf16.msra.mxu0 0
    %131 = vmatprep.subr.bf16.mxu0 0
    %132 = vmatpush1.bf16.msra.mxu0 0
    %133 = vmatprep.mubr.bf16.mxu0 0
    %134 = vmatmul.mubr.bf16.gmra.mrb[0].mxu0 %v92
    %v135 = vpop.f32.mrb[0].mxu0
    %v136 = vadd.f32 %v79, %v135
    %v137 = vpop.f32.mrb[0].mxu0
    %v138 = vpop.f32.mrb[0].mxu0
    %v139 = vadd.f32 %v79, %v138
    %v140 = vpop.f32.mrb[0].mxu0
    %141 = vmatprep.mubr.bf16.mxu0 0
    %142 = vmatmul.mubr.bf16.gmra.mrb[0].mxu0 %v95
    %v143 = vpop.f32.mrb[0].mxu0
    %v144 = vadd.f32 %v79, %v143
    %v145 = vpop.f32.mrb[0].mxu0
    %v146 = vpop.f32.mrb[0].mxu0
    %v147 = vadd.f32 %v79, %v146
    %v148 = vpop.f32.mrb[0].mxu0
    %149 = vdwg.mxu0
    %v158 = vunpack.c.l.b16 %v45
    %v159 = vunpack.c.l.b16 %v46
    %v160 = vunpack.c.l.b16 %v47
    %v161 = vunpack.c.l.b16 %v48
    %v162 = vunpack.c.l.b16 %v49
    %v163 = vunpack.c.l.b16 %v50
    %v164 = vunpack.c.l.b16 %v51
    %v165 = vunpack.c.l.b16 %v52
    %v166 = vpack.c.b16 %v159, %v158
    %v167 = vpack.c.b16 %v161, %v160
    %v168 = vpack.c.b16 %v163, %v162
    %v169 = vpack.c.b16 %v165, %v164
    %vm174 = vcmask 523264
    %v176 = vsel %vm174, 0, 0
    %178 = vmatprep.subr.bf16.mxu0 0
    %179 = vmatpush1.bf16.msra.mxu0 %v166
    %180 = vmatprep.subr.bf16.mxu0 0
    %181 = vmatpush1.bf16.msra.mxu0 %v167
    %182 = vmatprep.subr.bf16.mxu0 0
    %183 = vmatpush1.bf16.msra.mxu0 %v168
    %184 = vmatprep.subr.bf16.mxu0 0
    %185 = vmatpush1.bf16.msra.mxu0 %v169
    %186 = vmatprep.subr.bf16.mxu0 0
    %187 = vmatpush1.bf16.msra.mxu0 0
    %188 = vmatprep.subr.bf16.mxu0 0
    %189 = vmatpush1.bf16.msra.mxu0 0
    %190 = vmatprep.subr.bf16.mxu0 0
    %191 = vmatpush1.bf16.msra.mxu0 0
    %192 = vmatprep.subr.bf16.mxu0 0
    %193 = vmatpush1.bf16.msra.mxu0 0
    %194 = vmatprep.subr.bf16.mxu0 0
    %195 = vmatpush1.bf16.msra.mxu0 0
    %196 = vmatprep.subr.bf16.mxu0 0
    %197 = vmatpush1.bf16.msra.mxu0 0
    %198 = vmatprep.subr.bf16.mxu0 0
    %199 = vmatpush1.bf16.msra.mxu0 0
    %200 = vmatprep.subr.bf16.mxu0 0
    %201 = vmatpush1.bf16.msra.mxu0 0
    %202 = vmatprep.subr.bf16.mxu0 0
    %203 = vmatpush1.bf16.msra.mxu0 0
    %204 = vmatprep.subr.bf16.mxu0 0
    %205 = vmatpush1.bf16.msra.mxu0 0
    %206 = vmatprep.subr.bf16.mxu0 0
    %207 = vmatpush1.bf16.msra.mxu0 0
    %208 = vmatprep.subr.bf16.mxu0 0
    %209 = vmatpush1.bf16.msra.mxu0 0
    %210 = vmatprep.mubr.bf16.mxu0 0
    %211 = vmatmul.mubr.bf16.gmra.mrb[0].mxu0 %v176
    %v212 = vpop.f32.mrb[0].mxu0
    %v213 = vadd.f32 0.0, %v212
    %v214 = vpop.f32.mrb[0].mxu0
    %v215 = vpop.f32.mrb[0].mxu0
    %v216 = vpop.f32.mrb[0].mxu0
    %217 = vdwg.mxu0
    %v218 = vadd.f32 %v136, %v213
    %v219 = vtanh.pop %v218
    %v220 = vpack.c.bf16 %v219, %v219
    %v229 = vunpack.c.l.b16 %v53
    %v230 = vunpack.c.l.b16 %v54
    %v231 = vunpack.c.l.b16 %v55
    %v232 = vunpack.c.l.b16 %v56
    %v233 = vunpack.c.l.b16 %v57
    %v234 = vunpack.c.l.b16 %v58
    %v235 = vunpack.c.l.b16 %v59
    %v236 = vunpack.c.l.b16 %v60
    %v237 = vpack.c.b16 %v230, %v229
    %v238 = vpack.c.b16 %v232, %v231
    %v239 = vpack.c.b16 %v234, %v233
    %v240 = vpack.c.b16 %v236, %v235
    %245 = vmatprep.subr.bf16.mxu0 0
    %246 = vmatpush1.bf16.msra.mxu0 %v237
    %247 = vmatprep.subr.bf16.mxu0 0
    %248 = vmatpush1.bf16.msra.mxu0 %v238
    %249 = vmatprep.subr.bf16.mxu0 0
    %250 = vmatpush1.bf16.msra.mxu0 %v239
    %251 = vmatprep.subr.bf16.mxu0 0
    %252 = vmatpush1.bf16.msra.mxu0 %v240
    %253 = vmatprep.subr.bf16.mxu0 0
    %254 = vmatpush1.bf16.msra.mxu0 0
    %255 = vmatprep.subr.bf16.mxu0 0
    %256 = vmatpush1.bf16.msra.mxu0 0
    %257 = vmatprep.subr.bf16.mxu0 0
    %258 = vmatpush1.bf16.msra.mxu0 0
    %259 = vmatprep.subr.bf16.mxu0 0
    %260 = vmatpush1.bf16.msra.mxu0 0
    %261 = vmatprep.subr.bf16.mxu0 0
    %262 = vmatpush1.bf16.msra.mxu0 0
    %263 = vmatprep.subr.bf16.mxu0 0
    %264 = vmatpush1.bf16.msra.mxu0 0
    %265 = vmatprep.subr.bf16.mxu0 0
    %266 = vmatpush1.bf16.msra.mxu0 0
    %267 = vmatprep.subr.bf16.mxu0 0
    %268 = vmatpush1.bf16.msra.mxu0 0
    %269 = vmatprep.subr.bf16.mxu0 0
    %270 = vmatpush1.bf16.msra.mxu0 0
    %271 = vmatprep.subr.bf16.mxu0 0
    %272 = vmatpush1.bf16.msra.mxu0 0
    %273 = vmatprep.subr.bf16.mxu0 0
    %274 = vmatpush1.bf16.msra.mxu0 0
    %275 = vmatprep.subr.bf16.mxu0 0
    %276 = vmatpush1.bf16.msra.mxu0 0
    %277 = vmatprep.mubr.bf16.mxu0 0
    %278 = vmatmul.mubr.bf16.gmra.mrb[0].mxu0 %v176
    %v279 = vpop.f32.mrb[0].mxu0
    %v280 = vadd.f32 0.0, %v279
    %v281 = vpop.f32.mrb[0].mxu0
    %v282 = vpop.f32.mrb[0].mxu0
    %v283 = vpop.f32.mrb[0].mxu0
    %284 = vdwg.mxu0
    %v293 = vunpack.c.l.b16 %v37
    %v294 = vunpack.c.l.b16 %v38
    %v295 = vunpack.c.l.b16 %v39
    %v296 = vunpack.c.l.b16 %v40
    %v297 = vunpack.c.l.b16 %v41
    %v298 = vunpack.c.l.b16 %v42
    %v299 = vunpack.c.l.b16 %v43
    %v300 = vunpack.c.l.b16 %v44
    %v301 = vpack.c.b16 %v294, %v293
    %v302 = vpack.c.b16 %v296, %v295
    %v303 = vpack.c.b16 %v298, %v297
    %v304 = vpack.c.b16 %v300, %v299
    %v310 = vsel %vm174, %v220, 0
    %312 = vmatprep.subr.bf16.mxu0 0
    %313 = vmatpush1.bf16.msra.mxu0 %v301
    %314 = vmatprep.subr.bf16.mxu0 0
    %315 = vmatpush1.bf16.msra.mxu0 %v302
    %316 = vmatprep.subr.bf16.mxu0 0
    %317 = vmatpush1.bf16.msra.mxu0 %v303
    %318 = vmatprep.subr.bf16.mxu0 0
    %319 = vmatpush1.bf16.msra.mxu0 %v304
    %320 = vmatprep.subr.bf16.mxu0 0
    %321 = vmatpush1.bf16.msra.mxu0 0
    %322 = vmatprep.subr.bf16.mxu0 0
    %323 = vmatpush1.bf16.msra.mxu0 0
    %324 = vmatprep.subr.bf16.mxu0 0
    %325 = vmatpush1.bf16.msra.mxu0 0
    %326 = vmatprep.subr.bf16.mxu0 0
    %327 = vmatpush1.bf16.msra.mxu0 0
    %328 = vmatprep.subr.bf16.mxu0 0
    %329 = vmatpush1.bf16.msra.mxu0 0
    %330 = vmatprep.subr.bf16.mxu0 0
    %331 = vmatpush1.bf16.msra.mxu0 0
    %332 = vmatprep.subr.bf16.mxu0 0
    %333 = vmatpush1.bf16.msra.mxu0 0
    %334 = vmatprep.subr.bf16.mxu0 0
    %335 = vmatpush1.bf16.msra.mxu0 0
    %336 = vmatprep.subr.bf16.mxu0 0
    %337 = vmatpush1.bf16.msra.mxu0 0
    %338 = vmatprep.subr.bf16.mxu0 0
    %339 = vmatpush1.bf16.msra.mxu0 0
    %340 = vmatprep.subr.bf16.mxu0 0
    %341 = vmatpush1.bf16.msra.mxu0 0
    %342 = vmatprep.subr.bf16.mxu0 0
    %343 = vmatpush1.bf16.msra.mxu0 0
    %344 = vmatprep.mubr.bf16.mxu0 0
    %345 = vmatmul.mubr.bf16.gmra.mrb[0].mxu0 %v310
    %v346 = vpop.f32.mrb[0].mxu0
    %v347 = vadd.f32 %v280, %v346
    %v348 = vpop.f32.mrb[0].mxu0
    %v349 = vpop.f32.mrb[0].mxu0
    %v350 = vpop.f32.mrb[0].mxu0
    %351 = vdwg.mxu0
    %v352 = vadd.f32 %v347, %v67
    %v353 = vtanh.pop %v352
    %354 = vmatprep.subr.bf16.mxu0 0
    %355 = vmatpush1.bf16.msra.mxu0 %v166
    %356 = vmatprep.subr.bf16.mxu0 0
    %357 = vmatpush1.bf16.msra.mxu0 %v167
    %358 = vmatprep.subr.bf16.mxu0 0
    %359 = vmatpush1.bf16.msra.mxu0 %v168
    %360 = vmatprep.subr.bf16.mxu0 0
    %361 = vmatpush1.bf16.msra.mxu0 %v169
    %362 = vmatprep.subr.bf16.mxu0 0
    %363 = vmatpush1.bf16.msra.mxu0 0
    %364 = vmatprep.subr.bf16.mxu0 0
    %365 = vmatpush1.bf16.msra.mxu0 0
    %366 = vmatprep.subr.bf16.mxu0 0
    %367 = vmatpush1.bf16.msra.mxu0 0
    %368 = vmatprep.subr.bf16.mxu0 0
    %369 = vmatpush1.bf16.msra.mxu0 0
    %370 = vmatprep.subr.bf16.mxu0 0
    %371 = vmatpush1.bf16.msra.mxu0 0
    %372 = vmatprep.subr.bf16.mxu0 0
    %373 = vmatpush1.bf16.msra.mxu0 0
    %374 = vmatprep.subr.bf16.mxu0 0
    %375 = vmatpush1.bf16.msra.mxu0 0
    %376 = vmatprep.subr.bf16.mxu0 0
    %377 = vmatpush1.bf16.msra.mxu0 0
    %378 = vmatprep.subr.bf16.mxu0 0
    %379 = vmatpush1.bf16.msra.mxu0 0
    %380 = vmatprep.subr.bf16.mxu0 0
    %381 = vmatpush1.bf16.msra.mxu0 0
    %382 = vmatprep.subr.bf16.mxu0 0
    %383 = vmatpush1.bf16.msra.mxu0 0
    %384 = vmatprep.subr.bf16.mxu0 0
    %385 = vmatpush1.bf16.msra.mxu0 0
    %386 = vmatprep.mubr.bf16.mxu0 0
    %387 = vmatmul.mubr.bf16.gmra.mrb[0].mxu0 %v310
    %v388 = vpop.f32.mrb[0].mxu0
    %v389 = vadd.f32 0.0, %v388
    %v390 = vpop.f32.mrb[0].mxu0
    %v391 = vpop.f32.mrb[0].mxu0
    %v392 = vpop.f32.mrb[0].mxu0
    %393 = vdwg.mxu0
    %v395 = vrot.slane %v389, 6
    %v397 = vadd.f32 %v136, %v395
    %v398 = vtanh.pop %v397
    %v399 = vpack.c.bf16 %v398, %v398
    %v400 = vpack.c.bf16 %v353, %v353
    %v402 = vsel %vm174, %v400, 0
    %404 = vmatprep.subr.bf16.mxu0 0
    %405 = vmatpush1.bf16.msra.mxu0 %v237
    %406 = vmatprep.subr.bf16.mxu0 0
    %407 = vmatpush1.bf16.msra.mxu0 %v238
    %408 = vmatprep.subr.bf16.mxu0 0
    %409 = vmatpush1.bf16.msra.mxu0 %v239
    %410 = vmatprep.subr.bf16.mxu0 0
    %411 = vmatpush1.bf16.msra.mxu0 %v240
    %412 = vmatprep.subr.bf16.mxu0 0
    %413 = vmatpush1.bf16.msra.mxu0 0
    %414 = vmatprep.subr.bf16.mxu0 0
    %415 = vmatpush1.bf16.msra.mxu0 0
    %416 = vmatprep.subr.bf16.mxu0 0
    %417 = vmatpush1.bf16.msra.mxu0 0
    %418 = vmatprep.subr.bf16.mxu0 0
    %419 = vmatpush1.bf16.msra.mxu0 0
    %420 = vmatprep.subr.bf16.mxu0 0
    %421 = vmatpush1.bf16.msra.mxu0 0
    %422 = vmatprep.subr.bf16.mxu0 0
    %423 = vmatpush1.bf16.msra.mxu0 0
    %424 = vmatprep.subr.bf16.mxu0 0
    %425 = vmatpush1.bf16.msra.mxu0 0
    %426 = vmatprep.subr.bf16.mxu0 0
    %427 = vmatpush1.bf16.msra.mxu0 0
    %428 = vmatprep.subr.bf16.mxu0 0
    %429 = vmatpush1.bf16.msra.mxu0 0
    %430 = vmatprep.subr.bf16.mxu0 0
    %431 = vmatpush1.bf16.msra.mxu0 0
    %432 = vmatprep.subr.bf16.mxu0 0
    %433 = vmatpush1.bf16.msra.mxu0 0
    %434 = vmatprep.subr.bf16.mxu0 0
    %435 = vmatpush1.bf16.msra.mxu0 0
    %436 = vmatprep.mubr.bf16.mxu0 0
    %437 = vmatmul.mubr.bf16.gmra.mrb[0].mxu0 %v402
    %v438 = vpop.f32.mrb[0].mxu0
    %v439 = vadd.f32 0.0, %v438
    %v440 = vpop.f32.mrb[0].mxu0
    %v441 = vpop.f32.mrb[0].mxu0
    %v442 = vpop.f32.mrb[0].mxu0
    %443 = vdwg.mxu0
    %v445 = vrot.slane %v399, 1
    %v447 = vsel %vm174, %v445, 0
    %449 = vmatprep.subr.bf16.mxu0 0
    %450 = vmatpush1.bf16.msra.mxu0 %v301
    %451 = vmatprep.subr.bf16.mxu0 0
    %452 = vmatpush1.bf16.msra.mxu0 %v302
    %453 = vmatprep.subr.bf16.mxu0 0
    %454 = vmatpush1.bf16.msra.mxu0 %v303
    %455 = vmatprep.subr.bf16.mxu0 0
    %456 = vmatpush1.bf16.msra.mxu0 %v304
    %457 = vmatprep.subr.bf16.mxu0 0
    %458 = vmatpush1.bf16.msra.mxu0 0
    %459 = vmatprep.subr.bf16.mxu0 0
    %460 = vmatpush1.bf16.msra.mxu0 0
    %461 = vmatprep.subr.bf16.mxu0 0
    %462 = vmatpush1.bf16.msra.mxu0 0
    %463 = vmatprep.subr.bf16.mxu0 0
    %464 = vmatpush1.bf16.msra.mxu0 0
    %465 = vmatprep.subr.bf16.mxu0 0
    %466 = vmatpush1.bf16.msra.mxu0 0
    %467 = vmatprep.subr.bf16.mxu0 0
    %468 = vmatpush1.bf16.msra.mxu0 0
    %469 = vmatprep.subr.bf16.mxu0 0
    %470 = vmatpush1.bf16.msra.mxu0 0
    %471 = vmatprep.subr.bf16.mxu0 0
    %472 = vmatpush1.bf16.msra.mxu0 0
    %473 = vmatprep.subr.bf16.mxu0 0
    %474 = vmatpush1.bf16.msra.mxu0 0
    %475 = vmatprep.subr.bf16.mxu0 0
    %476 = vmatpush1.bf16.msra.mxu0 0
    %477 = vmatprep.subr.bf16.mxu0 0
    %478 = vmatpush1.bf16.msra.mxu0 0
    %479 = vmatprep.subr.bf16.mxu0 0
    %480 = vmatpush1.bf16.msra.mxu0 0
    %481 = vmatprep.mubr.bf16.mxu0 0
    %482 = vmatmul.mubr.bf16.gmra.mrb[0].mxu0 %v447
    %v483 = vpop.f32.mrb[0].mxu0
    %v484 = vadd.f32 %v439, %v483
    %v485 = vpop.f32.mrb[0].mxu0
    %v486 = vpop.f32.mrb[0].mxu0
    %v487 = vpop.f32.mrb[0].mxu0
    %488 = vdwg.mxu0
    %v489 = vadd.f32 %v484, %v67
    %v490 = vtanh.pop %v489
    %491 = vmatprep.subr.bf16.mxu0 0
    %492 = vmatpush1.bf16.msra.mxu0 %v166
    %493 = vmatprep.subr.bf16.mxu0 0
    %494 = vmatpush1.bf16.msra.mxu0 %v167
    %495 = vmatprep.subr.bf16.mxu0 0
    %496 = vmatpush1.bf16.msra.mxu0 %v168
    %497 = vmatprep.subr.bf16.mxu0 0
    %498 = vmatpush1.bf16.msra.mxu0 %v169
    %499 = vmatprep.subr.bf16.mxu0 0
    %500 = vmatpush1.bf16.msra.mxu0 0
    %501 = vmatprep.subr.bf16.mxu0 0
    %502 = vmatpush1.bf16.msra.mxu0 0
    %503 = vmatprep.subr.bf16.mxu0 0
    %504 = vmatpush1.bf16.msra.mxu0 0
    %505 = vmatprep.subr.bf16.mxu0 0
    %506 = vmatpush1.bf16.msra.mxu0 0
    %507 = vmatprep.subr.bf16.mxu0 0
    %508 = vmatpush1.bf16.msra.mxu0 0
    %509 = vmatprep.subr.bf16.mxu0 0
    %510 = vmatpush1.bf16.msra.mxu0 0
    %511 = vmatprep.subr.bf16.mxu0 0
    %512 = vmatpush1.bf16.msra.mxu0 0
    %513 = vmatprep.subr.bf16.mxu0 0
    %514 = vmatpush1.bf16.msra.mxu0 0
    %515 = vmatprep.subr.bf16.mxu0 0
    %516 = vmatpush1.bf16.msra.mxu0 0
    %517 = vmatprep.subr.bf16.mxu0 0
    %518 = vmatpush1.bf16.msra.mxu0 0
    %519 = vmatprep.subr.bf16.mxu0 0
    %520 = vmatpush1.bf16.msra.mxu0 0
    %521 = vmatprep.subr.bf16.mxu0 0
    %522 = vmatpush1.bf16.msra.mxu0 0
    %523 = vmatprep.mubr.bf16.mxu0 0
    %524 = vmatmul.mubr.bf16.gmra.mrb[0].mxu0 %v447
    %v525 = vpop.f32.mrb[0].mxu0
    %v526 = vadd.f32 0.0, %v525
    %v527 = vpop.f32.mrb[0].mxu0
    %v528 = vpop.f32.mrb[0].mxu0
    %v529 = vpop.f32.mrb[0].mxu0
    %530 = vdwg.mxu0
    %v532 = vrot.slane %v526, 4
    %v534 = vadd.f32 %v136, %v532
    %v535 = vtanh.pop %v534
    %v536 = vpack.c.bf16 %v535, %v535
    %v537 = vpack.c.bf16 %v490, %v490
    %v539 = vsel %vm174, %v537, 0
    %541 = vmatprep.subr.bf16.mxu0 0
    %542 = vmatpush1.bf16.msra.mxu0 %v237
    %543 = vmatprep.subr.bf16.mxu0 0
    %544 = vmatpush1.bf16.msra.mxu0 %v238
    %545 = vmatprep.subr.bf16.mxu0 0
    %546 = vmatpush1.bf16.msra.mxu0 %v239
    %547 = vmatprep.subr.bf16.mxu0 0
    %548 = vmatpush1.bf16.msra.mxu0 %v240
    %549 = vmatprep.subr.bf16.mxu0 0
    %550 = vmatpush1.bf16.msra.mxu0 0
    %551 = vmatprep.subr.bf16.mxu0 0
    %552 = vmatpush1.bf16.msra.mxu0 0
    %553 = vmatprep.subr.bf16.mxu0 0
    %554 = vmatpush1.bf16.msra.mxu0 0
    %555 = vmatprep.subr.bf16.mxu0 0
    %556 = vmatpush1.bf16.msra.mxu0 0
    %557 = vmatprep.subr.bf16.mxu0 0
    %558 = vmatpush1.bf16.msra.mxu0 0
    %559 = vmatprep.subr.bf16.mxu0 0
    %560 = vmatpush1.bf16.msra.mxu0 0
    %561 = vmatprep.subr.bf16.mxu0 0
    %562 = vmatpush1.bf16.msra.mxu0 0
    %563 = vmatprep.subr.bf16.mxu0 0
    %564 = vmatpush1.bf16.msra.mxu0 0
    %565 = vmatprep.subr.bf16.mxu0 0
    %566 = vmatpush1.bf16.msra.mxu0 0
    %567 = vmatprep.subr.bf16.mxu0 0
    %568 = vmatpush1.bf16.msra.mxu0 0
    %569 = vmatprep.subr.bf16.mxu0 0
    %570 = vmatpush1.bf16.msra.mxu0 0
    %571 = vmatprep.subr.bf16.mxu0 0
    %572 = vmatpush1.bf16.msra.mxu0 0
    %573 = vmatprep.mubr.bf16.mxu0 0
    %574 = vmatmul.mubr.bf16.gmra.mrb[0].mxu0 %v539
    %v575 = vpop.f32.mrb[0].mxu0
    %v576 = vadd.f32 0.0, %v575
    %v577 = vpop.f32.mrb[0].mxu0
    %v578 = vpop.f32.mrb[0].mxu0
    %v579 = vpop.f32.mrb[0].mxu0
    %580 = vdwg.mxu0
    %v582 = vrot.slane %v536, 2
    %v584 = vsel %vm174, %v582, 0
    %586 = vmatprep.subr.bf16.mxu0 0
    %587 = vmatpush1.bf16.msra.mxu0 %v301
    %588 = vmatprep.subr.bf16.mxu0 0
    %589 = vmatpush1.bf16.msra.mxu0 %v302
    %590 = vmatprep.subr.bf16.mxu0 0
    %591 = vmatpush1.bf16.msra.mxu0 %v303
    %592 = vmatprep.subr.bf16.mxu0 0
    %593 = vmatpush1.bf16.msra.mxu0 %v304
    %594 = vmatprep.subr.bf16.mxu0 0
    %595 = vmatpush1.bf16.msra.mxu0 0
    %596 = vmatprep.subr.bf16.mxu0 0
    %597 = vmatpush1.bf16.msra.mxu0 0
    %598 = vmatprep.subr.bf16.mxu0 0
    %599 = vmatpush1.bf16.msra.mxu0 0
    %600 = vmatprep.subr.bf16.mxu0 0
    %601 = vmatpush1.bf16.msra.mxu0 0
    %602 = vmatprep.subr.bf16.mxu0 0
    %603 = vmatpush1.bf16.msra.mxu0 0
    %604 = vmatprep.subr.bf16.mxu0 0
    %605 = vmatpush1.bf16.msra.mxu0 0
    %606 = vmatprep.subr.bf16.mxu0 0
    %607 = vmatpush1.bf16.msra.mxu0 0
    %608 = vmatprep.subr.bf16.mxu0 0
    %609 = vmatpush1.bf16.msra.mxu0 0
    %610 = vmatprep.subr.bf16.mxu0 0
    %611 = vmatpush1.bf16.msra.mxu0 0
    %612 = vmatprep.subr.bf16.mxu0 0
    %613 = vmatpush1.bf16.msra.mxu0 0
    %614 = vmatprep.subr.bf16.mxu0 0
    %615 = vmatpush1.bf16.msra.mxu0 0
    %616 = vmatprep.subr.bf16.mxu0 0
    %617 = vmatpush1.bf16.msra.mxu0 0
    %618 = vmatprep.mubr.bf16.mxu0 0
    %619 = vmatmul.mubr.bf16.gmra.mrb[0].mxu0 %v584
    %v620 = vpop.f32.mrb[0].mxu0
    %v621 = vadd.f32 %v576, %v620
    %v622 = vpop.f32.mrb[0].mxu0
    %v623 = vpop.f32.mrb[0].mxu0
    %v624 = vpop.f32.mrb[0].mxu0
    %625 = vdwg.mxu0
    %v626 = vadd.f32 %v621, %v67
    %v627 = vtanh.pop %v626
    %628 = vmatprep.subr.bf16.mxu0 0
    %629 = vmatpush1.bf16.msra.mxu0 %v166
    %630 = vmatprep.subr.bf16.mxu0 0
    %631 = vmatpush1.bf16.msra.mxu0 %v167
    %632 = vmatprep.subr.bf16.mxu0 0
    %633 = vmatpush1.bf16.msra.mxu0 %v168
    %634 = vmatprep.subr.bf16.mxu0 0
    %635 = vmatpush1.bf16.msra.mxu0 %v169
    %636 = vmatprep.subr.bf16.mxu0 0
    %637 = vmatpush1.bf16.msra.mxu0 0
    %638 = vmatprep.subr.bf16.mxu0 0
    %639 = vmatpush1.bf16.msra.mxu0 0
    %640 = vmatprep.subr.bf16.mxu0 0
    %641 = vmatpush1.bf16.msra.mxu0 0
    %642 = vmatprep.subr.bf16.mxu0 0
    %643 = vmatpush1.bf16.msra.mxu0 0
    %644 = vmatprep.subr.bf16.mxu0 0
    %645 = vmatpush1.bf16.msra.mxu0 0
    %646 = vmatprep.subr.bf16.mxu0 0
    %647 = vmatpush1.bf16.msra.mxu0 0
    %648 = vmatprep.subr.bf16.mxu0 0
    %649 = vmatpush1.bf16.msra.mxu0 0
    %650 = vmatprep.subr.bf16.mxu0 0
    %651 = vmatpush1.bf16.msra.mxu0 0
    %652 = vmatprep.subr.bf16.mxu0 0
    %653 = vmatpush1.bf16.msra.mxu0 0
    %654 = vmatprep.subr.bf16.mxu0 0
    %655 = vmatpush1.bf16.msra.mxu0 0
    %656 = vmatprep.subr.bf16.mxu0 0
    %657 = vmatpush1.bf16.msra.mxu0 0
    %658 = vmatprep.subr.bf16.mxu0 0
    %659 = vmatpush1.bf16.msra.mxu0 0
    %660 = vmatprep.mubr.bf16.mxu0 0
    %661 = vmatmul.mubr.bf16.gmra.mrb[0].mxu0 %v584
    %v662 = vpop.f32.mrb[0].mxu0
    %v663 = vadd.f32 0.0, %v662
    %v664 = vpop.f32.mrb[0].mxu0
    %v665 = vpop.f32.mrb[0].mxu0
    %v666 = vpop.f32.mrb[0].mxu0
    %667 = vdwg.mxu0
    %v669 = vrot.slane %v663, 2
    %v671 = vadd.f32 %v136, %v669
    %v672 = vtanh.pop %v671
    %v673 = vpack.c.bf16 %v672, %v672
    %v674 = vpack.c.bf16 %v627, %v627
    %v676 = vsel %vm174, %v674, 0
    %678 = vmatprep.subr.bf16.mxu0 0
    %679 = vmatpush1.bf16.msra.mxu0 %v237
    %680 = vmatprep.subr.bf16.mxu0 0
    %681 = vmatpush1.bf16.msra.mxu0 %v238
    %682 = vmatprep.subr.bf16.mxu0 0
    %683 = vmatpush1.bf16.msra.mxu0 %v239
    %684 = vmatprep.subr.bf16.mxu0 0
    %685 = vmatpush1.bf16.msra.mxu0 %v240
    %686 = vmatprep.subr.bf16.mxu0 0
    %687 = vmatpush1.bf16.msra.mxu0 0
    %688 = vmatprep.subr.bf16.mxu0 0
    %689 = vmatpush1.bf16.msra.mxu0 0
    %690 = vmatprep.subr.bf16.mxu0 0
    %691 = vmatpush1.bf16.msra.mxu0 0
    %692 = vmatprep.subr.bf16.mxu0 0
    %693 = vmatpush1.bf16.msra.mxu0 0
    %694 = vmatprep.subr.bf16.mxu0 0
    %695 = vmatpush1.bf16.msra.mxu0 0
    %696 = vmatprep.subr.bf16.mxu0 0
    %697 = vmatpush1.bf16.msra.mxu0 0
    %698 = vmatprep.subr.bf16.mxu0 0
    %699 = vmatpush1.bf16.msra.mxu0 0
    %700 = vmatprep.subr.bf16.mxu0 0
    %701 = vmatpush1.bf16.msra.mxu0 0
    %702 = vmatprep.subr.bf16.mxu0 0
    %703 = vmatpush1.bf16.msra.mxu0 0
    %704 = vmatprep.subr.bf16.mxu0 0
    %705 = vmatpush1.bf16.msra.mxu0 0
    %706 = vmatprep.subr.bf16.mxu0 0
    %707 = vmatpush1.bf16.msra.mxu0 0
    %708 = vmatprep.subr.bf16.mxu0 0
    %709 = vmatpush1.bf16.msra.mxu0 0
    %710 = vmatprep.mubr.bf16.mxu0 0
    %711 = vmatmul.mubr.bf16.gmra.mrb[0].mxu0 %v676
    %v712 = vpop.f32.mrb[0].mxu0
    %v713 = vadd.f32 0.0, %v712
    %v714 = vpop.f32.mrb[0].mxu0
    %v715 = vpop.f32.mrb[0].mxu0
    %v716 = vpop.f32.mrb[0].mxu0
    %717 = vdwg.mxu0
    %v719 = vrot.slane %v673, 3
    %v721 = vsel %vm174, %v719, 0
    %723 = vmatprep.subr.bf16.mxu0 0
    %724 = vmatpush1.bf16.msra.mxu0 %v301
    %725 = vmatprep.subr.bf16.mxu0 0
    %726 = vmatpush1.bf16.msra.mxu0 %v302
    %727 = vmatprep.subr.bf16.mxu0 0
    %728 = vmatpush1.bf16.msra.mxu0 %v303
    %729 = vmatprep.subr.bf16.mxu0 0
    %730 = vmatpush1.bf16.msra.mxu0 %v304
    %731 = vmatprep.subr.bf16.mxu0 0
    %732 = vmatpush1.bf16.msra.mxu0 0
    %733 = vmatprep.subr.bf16.mxu0 0
    %734 = vmatpush1.bf16.msra.mxu0 0
    %735 = vmatprep.subr.bf16.mxu0 0
    %736 = vmatpush1.bf16.msra.mxu0 0
    %737 = vmatprep.subr.bf16.mxu0 0
    %738 = vmatpush1.bf16.msra.mxu0 0
    %739 = vmatprep.subr.bf16.mxu0 0
    %740 = vmatpush1.bf16.msra.mxu0 0
    %741 = vmatprep.subr.bf16.mxu0 0
    %742 = vmatpush1.bf16.msra.mxu0 0
    %743 = vmatprep.subr.bf16.mxu0 0
    %744 = vmatpush1.bf16.msra.mxu0 0
    %745 = vmatprep.subr.bf16.mxu0 0
    %746 = vmatpush1.bf16.msra.mxu0 0
    %747 = vmatprep.subr.bf16.mxu0 0
    %748 = vmatpush1.bf16.msra.mxu0 0
    %749 = vmatprep.subr.bf16.mxu0 0
    %750 = vmatpush1.bf16.msra.mxu0 0
    %751 = vmatprep.subr.bf16.mxu0 0
    %752 = vmatpush1.bf16.msra.mxu0 0
    %753 = vmatprep.subr.bf16.mxu0 0
    %754 = vmatpush1.bf16.msra.mxu0 0
    %755 = vmatprep.mubr.bf16.mxu0 0
    %756 = vmatmul.mubr.bf16.gmra.mrb[0].mxu0 %v721
    %v757 = vpop.f32.mrb[0].mxu0
    %v758 = vadd.f32 %v713, %v757
    %v759 = vpop.f32.mrb[0].mxu0
    %v760 = vpop.f32.mrb[0].mxu0
    %v761 = vpop.f32.mrb[0].mxu0
    %762 = vdwg.mxu0
    %v763 = vadd.f32 %v758, %v67
    %v764 = vtanh.pop %v763
    %765 = vmatprep.subr.bf16.mxu0 0
    %766 = vmatpush1.bf16.msra.mxu0 %v166
    %767 = vmatprep.subr.bf16.mxu0 0
    %768 = vmatpush1.bf16.msra.mxu0 %v167
    %769 = vmatprep.subr.bf16.mxu0 0
    %770 = vmatpush1.bf16.msra.mxu0 %v168
    %771 = vmatprep.subr.bf16.mxu0 0
    %772 = vmatpush1.bf16.msra.mxu0 %v169
    %773 = vmatprep.subr.bf16.mxu0 0
    %774 = vmatpush1.bf16.msra.mxu0 0
    %775 = vmatprep.subr.bf16.mxu0 0
    %776 = vmatpush1.bf16.msra.mxu0 0
    %777 = vmatprep.subr.bf16.mxu0 0
    %778 = vmatpush1.bf16.msra.mxu0 0
    %779 = vmatprep.subr.bf16.mxu0 0
    %780 = vmatpush1.bf16.msra.mxu0 0
    %781 = vmatprep.subr.bf16.mxu0 0
    %782 = vmatpush1.bf16.msra.mxu0 0
    %783 = vmatprep.subr.bf16.mxu0 0
    %784 = vmatpush1.bf16.msra.mxu0 0
    %785 = vmatprep.subr.bf16.mxu0 0
    %786 = vmatpush1.bf16.msra.mxu0 0
    %787 = vmatprep.subr.bf16.mxu0 0
    %788 = vmatpush1.bf16.msra.mxu0 0
    %789 = vmatprep.subr.bf16.mxu0 0
    %790 = vmatpush1.bf16.msra.mxu0 0
    %791 = vmatprep.subr.bf16.mxu0 0
    %792 = vmatpush1.bf16.msra.mxu0 0
    %793 = vmatprep.subr.bf16.mxu0 0
    %794 = vmatpush1.bf16.msra.mxu0 0
    %795 = vmatprep.subr.bf16.mxu0 0
    %796 = vmatpush1.bf16.msra.mxu0 0
    %797 = vmatprep.mubr.bf16.mxu0 0
    %798 = vmatmul.mubr.bf16.gmra.mrb[0].mxu0 %v721
    %v799 = vpop.f32.mrb[0].mxu0
    %v800 = vadd.f32 0.0, %v799
    %v801 = vpop.f32.mrb[0].mxu0
    %v802 = vpop.f32.mrb[0].mxu0
    %v803 = vpop.f32.mrb[0].mxu0
    %804 = vdwg.mxu0
    %v805 = vadd.f32 %v139, %v800
    %v806 = vtanh.pop %v805
    %v807 = vpack.c.bf16 %v806, %v806
    %v808 = vpack.c.bf16 %v764, %v764
    %v810 = vsel %vm174, %v808, 0
    %812 = vmatprep.subr.bf16.mxu0 0
    %813 = vmatpush1.bf16.msra.mxu0 %v237
    %814 = vmatprep.subr.bf16.mxu0 0
    %815 = vmatpush1.bf16.msra.mxu0 %v238
    %816 = vmatprep.subr.bf16.mxu0 0
    %817 = vmatpush1.bf16.msra.mxu0 %v239
    %818 = vmatprep.subr.bf16.mxu0 0
    %819 = vmatpush1.bf16.msra.mxu0 %v240
    %820 = vmatprep.subr.bf16.mxu0 0
    %821 = vmatpush1.bf16.msra.mxu0 0
    %822 = vmatprep.subr.bf16.mxu0 0
    %823 = vmatpush1.bf16.msra.mxu0 0
    %824 = vmatprep.subr.bf16.mxu0 0
    %825 = vmatpush1.bf16.msra.mxu0 0
    %826 = vmatprep.subr.bf16.mxu0 0
    %827 = vmatpush1.bf16.msra.mxu0 0
    %828 = vmatprep.subr.bf16.mxu0 0
    %829 = vmatpush1.bf16.msra.mxu0 0
    %830 = vmatprep.subr.bf16.mxu0 0
    %831 = vmatpush1.bf16.msra.mxu0 0
    %832 = vmatprep.subr.bf16.mxu0 0
    %833 = vmatpush1.bf16.msra.mxu0 0
    %834 = vmatprep.subr.bf16.mxu0 0
    %835 = vmatpush1.bf16.msra.mxu0 0
    %836 = vmatprep.subr.bf16.mxu0 0
    %837 = vmatpush1.bf16.msra.mxu0 0
    %838 = vmatprep.subr.bf16.mxu0 0
    %839 = vmatpush1.bf16.msra.mxu0 0
    %840 = vmatprep.subr.bf16.mxu0 0
    %841 = vmatpush1.bf16.msra.mxu0 0
    %842 = vmatprep.subr.bf16.mxu0 0
    %843 = vmatpush1.bf16.msra.mxu0 0
    %844 = vmatprep.mubr.bf16.mxu0 0
    %845 = vmatmul.mubr.bf16.gmra.mrb[0].mxu0 %v810
    %v846 = vpop.f32.mrb[0].mxu0
    %v847 = vadd.f32 0.0, %v846
    %v848 = vpop.f32.mrb[0].mxu0
    %v849 = vpop.f32.mrb[0].mxu0
    %v850 = vpop.f32.mrb[0].mxu0
    %851 = vdwg.mxu0
    %v853 = vsel %vm174, %v807, 0
    %855 = vmatprep.subr.bf16.mxu0 0
    %856 = vmatpush1.bf16.msra.mxu0 %v301
    %857 = vmatprep.subr.bf16.mxu0 0
    %858 = vmatpush1.bf16.msra.mxu0 %v302
    %859 = vmatprep.subr.bf16.mxu0 0
    %860 = vmatpush1.bf16.msra.mxu0 %v303
    %861 = vmatprep.subr.bf16.mxu0 0
    %862 = vmatpush1.bf16.msra.mxu0 %v304
    %863 = vmatprep.subr.bf16.mxu0 0
    %864 = vmatpush1.bf16.msra.mxu0 0
    %865 = vmatprep.subr.bf16.mxu0 0
    %866 = vmatpush1.bf16.msra.mxu0 0
    %867 = vmatprep.subr.bf16.mxu0 0
    %868 = vmatpush1.bf16.msra.mxu0 0
    %869 = vmatprep.subr.bf16.mxu0 0
    %870 = vmatpush1.bf16.msra.mxu0 0
    %871 = vmatprep.subr.bf16.mxu0 0
    %872 = vmatpush1.bf16.msra.mxu0 0
    %873 = vmatprep.subr.bf16.mxu0 0
    %874 = vmatpush1.bf16.msra.mxu0 0
    %875 = vmatprep.subr.bf16.mxu0 0
    %876 = vmatpush1.bf16.msra.mxu0 0
    %877 = vmatprep.subr.bf16.mxu0 0
    %878 = vmatpush1.bf16.msra.mxu0 0
    %879 = vmatprep.subr.bf16.mxu0 0
    %880 = vmatpush1.bf16.msra.mxu0 0
    %881 = vmatprep.subr.bf16.mxu0 0
    %882 = vmatpush1.bf16.msra.mxu0 0
    %883 = vmatprep.subr.bf16.mxu0 0
    %884 = vmatpush1.bf16.msra.mxu0 0
    %885 = vmatprep.subr.bf16.mxu0 0
    %886 = vmatpush1.bf16.msra.mxu0 0
    %887 = vmatprep.mubr.bf16.mxu0 0
    %888 = vmatmul.mubr.bf16.gmra.mrb[0].mxu0 %v853
    %v889 = vpop.f32.mrb[0].mxu0
    %v890 = vadd.f32 %v847, %v889
    %v891 = vpop.f32.mrb[0].mxu0
    %v892 = vpop.f32.mrb[0].mxu0
    %v893 = vpop.f32.mrb[0].mxu0
    %894 = vdwg.mxu0
    %v895 = vadd.f32 %v890, %v67
    %v896 = vtanh.pop %v895
    %897 = vmatprep.subr.bf16.mxu0 0
    %898 = vmatpush1.bf16.msra.mxu0 %v166
    %899 = vmatprep.subr.bf16.mxu0 0
    %900 = vmatpush1.bf16.msra.mxu0 %v167
    %901 = vmatprep.subr.bf16.mxu0 0
    %902 = vmatpush1.bf16.msra.mxu0 %v168
    %903 = vmatprep.subr.bf16.mxu0 0
    %904 = vmatpush1.bf16.msra.mxu0 %v169
    %905 = vmatprep.subr.bf16.mxu0 0
    %906 = vmatpush1.bf16.msra.mxu0 0
    %907 = vmatprep.subr.bf16.mxu0 0
    %908 = vmatpush1.bf16.msra.mxu0 0
    %909 = vmatprep.subr.bf16.mxu0 0
    %910 = vmatpush1.bf16.msra.mxu0 0
    %911 = vmatprep.subr.bf16.mxu0 0
    %912 = vmatpush1.bf16.msra.mxu0 0
    %913 = vmatprep.subr.bf16.mxu0 0
    %914 = vmatpush1.bf16.msra.mxu0 0
    %915 = vmatprep.subr.bf16.mxu0 0
    %916 = vmatpush1.bf16.msra.mxu0 0
    %917 = vmatprep.subr.bf16.mxu0 0
    %918 = vmatpush1.bf16.msra.mxu0 0
    %919 = vmatprep.subr.bf16.mxu0 0
    %920 = vmatpush1.bf16.msra.mxu0 0
    %921 = vmatprep.subr.bf16.mxu0 0
    %922 = vmatpush1.bf16.msra.mxu0 0
    %923 = vmatprep.subr.bf16.mxu0 0
    %924 = vmatpush1.bf16.msra.mxu0 0
    %925 = vmatprep.subr.bf16.mxu0 0
    %926 = vmatpush1.bf16.msra.mxu0 0
    %927 = vmatprep.subr.bf16.mxu0 0
    %928 = vmatpush1.bf16.msra.mxu0 0
    %929 = vmatprep.mubr.bf16.mxu0 0
    %930 = vmatmul.mubr.bf16.gmra.mrb[0].mxu0 %v853
    %v931 = vpop.f32.mrb[0].mxu0
    %v932 = vadd.f32 0.0, %v931
    %v933 = vpop.f32.mrb[0].mxu0
    %v934 = vpop.f32.mrb[0].mxu0
    %v935 = vpop.f32.mrb[0].mxu0
    %936 = vdwg.mxu0
    %v938 = vrot.slane %v932, 6
    %v940 = vadd.f32 %v139, %v938
    %v941 = vtanh.pop %v940
    %v942 = vpack.c.bf16 %v941, %v941
    %v943 = vpack.c.bf16 %v896, %v896
    %v945 = vsel %vm174, %v943, 0
    %947 = vmatprep.subr.bf16.mxu0 0
    %948 = vmatpush1.bf16.msra.mxu0 %v237
    %949 = vmatprep.subr.bf16.mxu0 0
    %950 = vmatpush1.bf16.msra.mxu0 %v238
    %951 = vmatprep.subr.bf16.mxu0 0
    %952 = vmatpush1.bf16.msra.mxu0 %v239
    %953 = vmatprep.subr.bf16.mxu0 0
    %954 = vmatpush1.bf16.msra.mxu0 %v240
    %955 = vmatprep.subr.bf16.mxu0 0
    %956 = vmatpush1.bf16.msra.mxu0 0
    %957 = vmatprep.subr.bf16.mxu0 0
    %958 = vmatpush1.bf16.msra.mxu0 0
    %959 = vmatprep.subr.bf16.mxu0 0
    %960 = vmatpush1.bf16.msra.mxu0 0
    %961 = vmatprep.subr.bf16.mxu0 0
    %962 = vmatpush1.bf16.msra.mxu0 0
    %963 = vmatprep.subr.bf16.mxu0 0
    %964 = vmatpush1.bf16.msra.mxu0 0
    %965 = vmatprep.subr.bf16.mxu0 0
    %966 = vmatpush1.bf16.msra.mxu0 0
    %967 = vmatprep.subr.bf16.mxu0 0
    %968 = vmatpush1.bf16.msra.mxu0 0
    %969 = vmatprep.subr.bf16.mxu0 0
    %970 = vmatpush1.bf16.msra.mxu0 0
    %971 = vmatprep.subr.bf16.mxu0 0
    %972 = vmatpush1.bf16.msra.mxu0 0
    %973 = vmatprep.subr.bf16.mxu0 0
    %974 = vmatpush1.bf16.msra.mxu0 0
    %975 = vmatprep.subr.bf16.mxu0 0
    %976 = vmatpush1.bf16.msra.mxu0 0
    %977 = vmatprep.subr.bf16.mxu0 0
    %978 = vmatpush1.bf16.msra.mxu0 0
    %979 = vmatprep.mubr.bf16.mxu0 0
    %980 = vmatmul.mubr.bf16.gmra.mrb[0].mxu0 %v945
    %v981 = vpop.f32.mrb[0].mxu0
    %v982 = vadd.f32 0.0, %v981
    %v983 = vpop.f32.mrb[0].mxu0
    %v984 = vpop.f32.mrb[0].mxu0
    %v985 = vpop.f32.mrb[0].mxu0
    %986 = vdwg.mxu0
    %v988 = vrot.slane %v942, 1
    %v990 = vsel %vm174, %v988, 0
    %992 = vmatprep.subr.bf16.mxu0 0
    %993 = vmatpush1.bf16.msra.mxu0 %v301
    %994 = vmatprep.subr.bf16.mxu0 0
    %995 = vmatpush1.bf16.msra.mxu0 %v302
    %996 = vmatprep.subr.bf16.mxu0 0
    %997 = vmatpush1.bf16.msra.mxu0 %v303
    %998 = vmatprep.subr.bf16.mxu0 0
    %999 = vmatpush1.bf16.msra.mxu0 %v304
    %1000 = vmatprep.subr.bf16.mxu0 0
    %1001 = vmatpush1.bf16.msra.mxu0 0
    %1002 = vmatprep.subr.bf16.mxu0 0
    %1003 = vmatpush1.bf16.msra.mxu0 0
    %1004 = vmatprep.subr.bf16.mxu0 0
    %1005 = vmatpush1.bf16.msra.mxu0 0
    %1006 = vmatprep.subr.bf16.mxu0 0
    %1007 = vmatpush1.bf16.msra.mxu0 0
    %1008 = vmatprep.subr.bf16.mxu0 0
    %1009 = vmatpush1.bf16.msra.mxu0 0
    %1010 = vmatprep.subr.bf16.mxu0 0
    %1011 = vmatpush1.bf16.msra.mxu0 0
    %1012 = vmatprep.subr.bf16.mxu0 0
    %1013 = vmatpush1.bf16.msra.mxu0 0
    %1014 = vmatprep.subr.bf16.mxu0 0
    %1015 = vmatpush1.bf16.msra.mxu0 0
    %1016 = vmatprep.subr.bf16.mxu0 0
    %1017 = vmatpush1.bf16.msra.mxu0 0
    %1018 = vmatprep.subr.bf16.mxu0 0
    %1019 = vmatpush1.bf16.msra.mxu0 0
    %1020 = vmatprep.subr.bf16.mxu0 0
    %1021 = vmatpush1.bf16.msra.mxu0 0
    %1022 = vmatprep.subr.bf16.mxu0 0
    %1023 = vmatpush1.bf16.msra.mxu0 0
    %1024 = vmatprep.mubr.bf16.mxu0 0
    %1025 = vmatmul.mubr.bf16.gmra.mrb[0].mxu0 %v990
    %v1026 = vpop.f32.mrb[0].mxu0
    %v1027 = vadd.f32 %v982, %v1026
    %v1028 = vpop.f32.mrb[0].mxu0
    %v1029 = vpop.f32.mrb[0].mxu0
    %v1030 = vpop.f32.mrb[0].mxu0
    %1031 = vdwg.mxu0
    %v1032 = vadd.f32 %v1027, %v67
    %v1033 = vtanh.pop %v1032
    %1034 = vmatprep.subr.bf16.mxu0 0
    %1035 = vmatpush1.bf16.msra.mxu0 %v166
    %1036 = vmatprep.subr.bf16.mxu0 0
    %1037 = vmatpush1.bf16.msra.mxu0 %v167
    %1038 = vmatprep.subr.bf16.mxu0 0
    %1039 = vmatpush1.bf16.msra.mxu0 %v168
    %1040 = vmatprep.subr.bf16.mxu0 0
    %1041 = vmatpush1.bf16.msra.mxu0 %v169
    %1042 = vmatprep.subr.bf16.mxu0 0
    %1043 = vmatpush1.bf16.msra.mxu0 0
    %1044 = vmatprep.subr.bf16.mxu0 0
    %1045 = vmatpush1.bf16.msra.mxu0 0
    %1046 = vmatprep.subr.bf16.mxu0 0
    %1047 = vmatpush1.bf16.msra.mxu0 0
    %1048 = vmatprep.subr.bf16.mxu0 0
    %1049 = vmatpush1.bf16.msra.mxu0 0
    %1050 = vmatprep.subr.bf16.mxu0 0
    %1051 = vmatpush1.bf16.msra.mxu0 0
    %1052 = vmatprep.subr.bf16.mxu0 0
    %1053 = vmatpush1.bf16.msra.mxu0 0
    %1054 = vmatprep.subr.bf16.mxu0 0
    %1055 = vmatpush1.bf16.msra.mxu0 0
    %1056 = vmatprep.subr.bf16.mxu0 0
    %1057 = vmatpush1.bf16.msra.mxu0 0
    %1058 = vmatprep.subr.bf16.mxu0 0
    %1059 = vmatpush1.bf16.msra.mxu0 0
    %1060 = vmatprep.subr.bf16.mxu0 0
    %1061 = vmatpush1.bf16.msra.mxu0 0
    %1062 = vmatprep.subr.bf16.mxu0 0
    %1063 = vmatpush1.bf16.msra.mxu0 0
    %1064 = vmatprep.subr.bf16.mxu0 0
    %1065 = vmatpush1.bf16.msra.mxu0 0
    %1066 = vmatprep.mubr.bf16.mxu0 0
    %1067 = vmatmul.mubr.bf16.gmra.mrb[0].mxu0 %v990
    %v1068 = vpop.f32.mrb[0].mxu0
    %v1069 = vadd.f32 0.0, %v1068
    %v1070 = vpop.f32.mrb[0].mxu0
    %v1071 = vpop.f32.mrb[0].mxu0
    %v1072 = vpop.f32.mrb[0].mxu0
    %1073 = vdwg.mxu0
    %v1075 = vrot.slane %v1069, 4
    %v1077 = vadd.f32 %v139, %v1075
    %v1078 = vtanh.pop %v1077
    %v1079 = vpack.c.bf16 %v1078, %v1078
    %v1080 = vpack.c.bf16 %v1033, %v1033
    %v1082 = vsel %vm174, %v1080, 0
    %1084 = vmatprep.subr.bf16.mxu0 0
    %1085 = vmatpush1.bf16.msra.mxu0 %v237
    %1086 = vmatprep.subr.bf16.mxu0 0
    %1087 = vmatpush1.bf16.msra.mxu0 %v238
    %1088 = vmatprep.subr.bf16.mxu0 0
    %1089 = vmatpush1.bf16.msra.mxu0 %v239
    %1090 = vmatprep.subr.bf16.mxu0 0
    %1091 = vmatpush1.bf16.msra.mxu0 %v240
    %1092 = vmatprep.subr.bf16.mxu0 0
    %1093 = vmatpush1.bf16.msra.mxu0 0
    %1094 = vmatprep.subr.bf16.mxu0 0
    %1095 = vmatpush1.bf16.msra.mxu0 0
    %1096 = vmatprep.subr.bf16.mxu0 0
    %1097 = vmatpush1.bf16.msra.mxu0 0
    %1098 = vmatprep.subr.bf16.mxu0 0
    %1099 = vmatpush1.bf16.msra.mxu0 0
    %1100 = vmatprep.subr.bf16.mxu0 0
    %1101 = vmatpush1.bf16.msra.mxu0 0
    %1102 = vmatprep.subr.bf16.mxu0 0
    %1103 = vmatpush1.bf16.msra.mxu0 0
    %1104 = vmatprep.subr.bf16.mxu0 0
    %1105 = vmatpush1.bf16.msra.mxu0 0
    %1106 = vmatprep.subr.bf16.mxu0 0
    %1107 = vmatpush1.bf16.msra.mxu0 0
    %1108 = vmatprep.subr.bf16.mxu0 0
    %1109 = vmatpush1.bf16.msra.mxu0 0
    %1110 = vmatprep.subr.bf16.mxu0 0
    %1111 = vmatpush1.bf16.msra.mxu0 0
    %1112 = vmatprep.subr.bf16.mxu0 0
    %1113 = vmatpush1.bf16.msra.mxu0 0
    %1114 = vmatprep.subr.bf16.mxu0 0
    %1115 = vmatpush1.bf16.msra.mxu0 0
    %1116 = vmatprep.mubr.bf16.mxu0 0
    %1117 = vmatmul.mubr.bf16.gmra.mrb[0].mxu0 %v1082
    %v1118 = vpop.f32.mrb[0].mxu0
    %v1119 = vadd.f32 0.0, %v1118
    %v1120 = vpop.f32.mrb[0].mxu0
    %v1121 = vpop.f32.mrb[0].mxu0
    %v1122 = vpop.f32.mrb[0].mxu0
    %1123 = vdwg.mxu0
    %v1125 = vrot.slane %v1079, 2
    %v1127 = vsel %vm174, %v1125, 0
    %1129 = vmatprep.subr.bf16.mxu0 0
    %1130 = vmatpush1.bf16.msra.mxu0 %v301
    %1131 = vmatprep.subr.bf16.mxu0 0
    %1132 = vmatpush1.bf16.msra.mxu0 %v302
    %1133 = vmatprep.subr.bf16.mxu0 0
    %1134 = vmatpush1.bf16.msra.mxu0 %v303
    %1135 = vmatprep.subr.bf16.mxu0 0
    %1136 = vmatpush1.bf16.msra.mxu0 %v304
    %1137 = vmatprep.subr.bf16.mxu0 0
    %1138 = vmatpush1.bf16.msra.mxu0 0
    %1139 = vmatprep.subr.bf16.mxu0 0
    %1140 = vmatpush1.bf16.msra.mxu0 0
    %1141 = vmatprep.subr.bf16.mxu0 0
    %1142 = vmatpush1.bf16.msra.mxu0 0
    %1143 = vmatprep.subr.bf16.mxu0 0
    %1144 = vmatpush1.bf16.msra.mxu0 0
    %1145 = vmatprep.subr.bf16.mxu0 0
    %1146 = vmatpush1.bf16.msra.mxu0 0
    %1147 = vmatprep.subr.bf16.mxu0 0
    %1148 = vmatpush1.bf16.msra.mxu0 0
    %1149 = vmatprep.subr.bf16.mxu0 0
    %1150 = vmatpush1.bf16.msra.mxu0 0
    %1151 = vmatprep.subr.bf16.mxu0 0
    %1152 = vmatpush1.bf16.msra.mxu0 0
    %1153 = vmatprep.subr.bf16.mxu0 0
    %1154 = vmatpush1.bf16.msra.mxu0 0
    %1155 = vmatprep.subr.bf16.mxu0 0
    %1156 = vmatpush1.bf16.msra.mxu0 0
    %1157 = vmatprep.subr.bf16.mxu0 0
    %1158 = vmatpush1.bf16.msra.mxu0 0
    %1159 = vmatprep.subr.bf16.mxu0 0
    %1160 = vmatpush1.bf16.msra.mxu0 0
    %1161 = vmatprep.mubr.bf16.mxu0 0
    %1162 = vmatmul.mubr.bf16.gmra.mrb[0].mxu0 %v1127
    %v1163 = vpop.f32.mrb[0].mxu0
    %v1164 = vadd.f32 %v1119, %v1163
    %v1165 = vpop.f32.mrb[0].mxu0
    %v1166 = vpop.f32.mrb[0].mxu0
    %v1167 = vpop.f32.mrb[0].mxu0
    %1168 = vdwg.mxu0
    %v1169 = vadd.f32 %v1164, %v67
    %v1170 = vtanh.pop %v1169
    %1171 = vmatprep.subr.bf16.mxu0 0
    %1172 = vmatpush1.bf16.msra.mxu0 %v166
    %1173 = vmatprep.subr.bf16.mxu0 0
    %1174 = vmatpush1.bf16.msra.mxu0 %v167
    %1175 = vmatprep.subr.bf16.mxu0 0
    %1176 = vmatpush1.bf16.msra.mxu0 %v168
    %1177 = vmatprep.subr.bf16.mxu0 0
    %1178 = vmatpush1.bf16.msra.mxu0 %v169
    %1179 = vmatprep.subr.bf16.mxu0 0
    %1180 = vmatpush1.bf16.msra.mxu0 0
    %1181 = vmatprep.subr.bf16.mxu0 0
    %1182 = vmatpush1.bf16.msra.mxu0 0
    %1183 = vmatprep.subr.bf16.mxu0 0
    %1184 = vmatpush1.bf16.msra.mxu0 0
    %1185 = vmatprep.subr.bf16.mxu0 0
    %1186 = vmatpush1.bf16.msra.mxu0 0
    %1187 = vmatprep.subr.bf16.mxu0 0
    %1188 = vmatpush1.bf16.msra.mxu0 0
    %1189 = vmatprep.subr.bf16.mxu0 0
    %1190 = vmatpush1.bf16.msra.mxu0 0
    %1191 = vmatprep.subr.bf16.mxu0 0
    %1192 = vmatpush1.bf16.msra.mxu0 0
    %1193 = vmatprep.subr.bf16.mxu0 0
    %1194 = vmatpush1.bf16.msra.mxu0 0
    %1195 = vmatprep.subr.bf16.mxu0 0
    %1196 = vmatpush1.bf16.msra.mxu0 0
    %1197 = vmatprep.subr.bf16.mxu0 0
    %1198 = vmatpush1.bf16.msra.mxu0 0
    %1199 = vmatprep.subr.bf16.mxu0 0
    %1200 = vmatpush1.bf16.msra.mxu0 0
    %1201 = vmatprep.subr.bf16.mxu0 0
    %1202 = vmatpush1.bf16.msra.mxu0 0
    %1203 = vmatprep.mubr.bf16.mxu0 0
    %1204 = vmatmul.mubr.bf16.gmra.mrb[0].mxu0 %v1127
    %v1205 = vpop.f32.mrb[0].mxu0
    %v1206 = vadd.f32 0.0, %v1205
    %v1207 = vpop.f32.mrb[0].mxu0
    %v1208 = vpop.f32.mrb[0].mxu0
    %v1209 = vpop.f32.mrb[0].mxu0
    %1210 = vdwg.mxu0
    %v1212 = vrot.slane %v1206, 2
    %v1214 = vadd.f32 %v139, %v1212
    %v1215 = vtanh.pop %v1214
    %v1216 = vpack.c.bf16 %v1215, %v1215
    %v1217 = vpack.c.bf16 %v1170, %v1170
    %v1219 = vsel %vm174, %v1217, 0
    %1221 = vmatprep.subr.bf16.mxu0 0
    %1222 = vmatpush1.bf16.msra.mxu0 %v237
    %1223 = vmatprep.subr.bf16.mxu0 0
    %1224 = vmatpush1.bf16.msra.mxu0 %v238
    %1225 = vmatprep.subr.bf16.mxu0 0
    %1226 = vmatpush1.bf16.msra.mxu0 %v239
    %1227 = vmatprep.subr.bf16.mxu0 0
    %1228 = vmatpush1.bf16.msra.mxu0 %v240
    %1229 = vmatprep.subr.bf16.mxu0 0
    %1230 = vmatpush1.bf16.msra.mxu0 0
    %1231 = vmatprep.subr.bf16.mxu0 0
    %1232 = vmatpush1.bf16.msra.mxu0 0
    %1233 = vmatprep.subr.bf16.mxu0 0
    %1234 = vmatpush1.bf16.msra.mxu0 0
    %1235 = vmatprep.subr.bf16.mxu0 0
    %1236 = vmatpush1.bf16.msra.mxu0 0
    %1237 = vmatprep.subr.bf16.mxu0 0
    %1238 = vmatpush1.bf16.msra.mxu0 0
    %1239 = vmatprep.subr.bf16.mxu0 0
    %1240 = vmatpush1.bf16.msra.mxu0 0
    %1241 = vmatprep.subr.bf16.mxu0 0
    %1242 = vmatpush1.bf16.msra.mxu0 0
    %1243 = vmatprep.subr.bf16.mxu0 0
    %1244 = vmatpush1.bf16.msra.mxu0 0
    %1245 = vmatprep.subr.bf16.mxu0 0
    %1246 = vmatpush1.bf16.msra.mxu0 0
    %1247 = vmatprep.subr.bf16.mxu0 0
    %1248 = vmatpush1.bf16.msra.mxu0 0
    %1249 = vmatprep.subr.bf16.mxu0 0
    %1250 = vmatpush1.bf16.msra.mxu0 0
    %1251 = vmatprep.subr.bf16.mxu0 0
    %1252 = vmatpush1.bf16.msra.mxu0 0
    %1253 = vmatprep.mubr.bf16.mxu0 0
    %1254 = vmatmul.mubr.bf16.gmra.mrb[0].mxu0 %v1219
    %v1255 = vpop.f32.mrb[0].mxu0
    %v1256 = vadd.f32 0.0, %v1255
    %v1257 = vpop.f32.mrb[0].mxu0
    %v1258 = vpop.f32.mrb[0].mxu0
    %v1259 = vpop.f32.mrb[0].mxu0
    %1260 = vdwg.mxu0
    %v1262 = vrot.slane %v1216, 3
    %v1264 = vsel %vm174, %v1262, 0
    %1266 = vmatprep.subr.bf16.mxu0 0
    %1267 = vmatpush1.bf16.msra.mxu0 %v301
    %1268 = vmatprep.subr.bf16.mxu0 0
    %1269 = vmatpush1.bf16.msra.mxu0 %v302
    %1270 = vmatprep.subr.bf16.mxu0 0
    %1271 = vmatpush1.bf16.msra.mxu0 %v303
    %1272 = vmatprep.subr.bf16.mxu0 0
    %1273 = vmatpush1.bf16.msra.mxu0 %v304
    %1274 = vmatprep.subr.bf16.mxu0 0
    %1275 = vmatpush1.bf16.msra.mxu0 0
    %1276 = vmatprep.subr.bf16.mxu0 0
    %1277 = vmatpush1.bf16.msra.mxu0 0
    %1278 = vmatprep.subr.bf16.mxu0 0
    %1279 = vmatpush1.bf16.msra.mxu0 0
    %1280 = vmatprep.subr.bf16.mxu0 0
    %1281 = vmatpush1.bf16.msra.mxu0 0
    %1282 = vmatprep.subr.bf16.mxu0 0
    %1283 = vmatpush1.bf16.msra.mxu0 0
    %1284 = vmatprep.subr.bf16.mxu0 0
    %1285 = vmatpush1.bf16.msra.mxu0 0
    %1286 = vmatprep.subr.bf16.mxu0 0
    %1287 = vmatpush1.bf16.msra.mxu0 0
    %1288 = vmatprep.subr.bf16.mxu0 0
    %1289 = vmatpush1.bf16.msra.mxu0 0
    %1290 = vmatprep.subr.bf16.mxu0 0
    %1291 = vmatpush1.bf16.msra.mxu0 0
    %1292 = vmatprep.subr.bf16.mxu0 0
    %1293 = vmatpush1.bf16.msra.mxu0 0
    %1294 = vmatprep.subr.bf16.mxu0 0
    %1295 = vmatpush1.bf16.msra.mxu0 0
    %1296 = vmatprep.subr.bf16.mxu0 0
    %1297 = vmatpush1.bf16.msra.mxu0 0
    %1298 = vmatprep.mubr.bf16.mxu0 0
    %1299 = vmatmul.mubr.bf16.gmra.mrb[0].mxu0 %v1264
    %v1300 = vpop.f32.mrb[0].mxu0
    %v1301 = vadd.f32 %v1256, %v1300
    %v1302 = vpop.f32.mrb[0].mxu0
    %v1303 = vpop.f32.mrb[0].mxu0
    %v1304 = vpop.f32.mrb[0].mxu0
    %1305 = vdwg.mxu0
    %v1306 = vadd.f32 %v1301, %v67
    %v1307 = vtanh.pop %v1306
    %1308 = vmatprep.subr.bf16.mxu0 0
    %1309 = vmatpush1.bf16.msra.mxu0 %v166
    %1310 = vmatprep.subr.bf16.mxu0 0
    %1311 = vmatpush1.bf16.msra.mxu0 %v167
    %1312 = vmatprep.subr.bf16.mxu0 0
    %1313 = vmatpush1.bf16.msra.mxu0 %v168
    %1314 = vmatprep.subr.bf16.mxu0 0
    %1315 = vmatpush1.bf16.msra.mxu0 %v169
    %1316 = vmatprep.subr.bf16.mxu0 0
    %1317 = vmatpush1.bf16.msra.mxu0 0
    %1318 = vmatprep.subr.bf16.mxu0 0
    %1319 = vmatpush1.bf16.msra.mxu0 0
    %1320 = vmatprep.subr.bf16.mxu0 0
    %1321 = vmatpush1.bf16.msra.mxu0 0
    %1322 = vmatprep.subr.bf16.mxu0 0
    %1323 = vmatpush1.bf16.msra.mxu0 0
    %1324 = vmatprep.subr.bf16.mxu0 0
    %1325 = vmatpush1.bf16.msra.mxu0 0
    %1326 = vmatprep.subr.bf16.mxu0 0
    %1327 = vmatpush1.bf16.msra.mxu0 0
    %1328 = vmatprep.subr.bf16.mxu0 0
    %1329 = vmatpush1.bf16.msra.mxu0 0
    %1330 = vmatprep.subr.bf16.mxu0 0
    %1331 = vmatpush1.bf16.msra.mxu0 0
    %1332 = vmatprep.subr.bf16.mxu0 0
    %1333 = vmatpush1.bf16.msra.mxu0 0
    %1334 = vmatprep.subr.bf16.mxu0 0
    %1335 = vmatpush1.bf16.msra.mxu0 0
    %1336 = vmatprep.subr.bf16.mxu0 0
    %1337 = vmatpush1.bf16.msra.mxu0 0
    %1338 = vmatprep.subr.bf16.mxu0 0
    %1339 = vmatpush1.bf16.msra.mxu0 0
    %1340 = vmatprep.mubr.bf16.mxu0 0
    %1341 = vmatmul.mubr.bf16.gmra.mrb[0].mxu0 %v1264
    %v1342 = vpop.f32.mrb[0].mxu0
    %v1343 = vadd.f32 0.0, %v1342
    %v1344 = vpop.f32.mrb[0].mxu0
    %v1345 = vpop.f32.mrb[0].mxu0
    %v1346 = vpop.f32.mrb[0].mxu0
    %1347 = vdwg.mxu0
    %v1348 = vadd.f32 %v144, %v1343
    %v1349 = vtanh.pop %v1348
    %v1350 = vpack.c.bf16 %v1349, %v1349
    %v1351 = vpack.c.bf16 %v1307, %v1307
    %v1353 = vsel %vm174, %v1351, 0
    %1355 = vmatprep.subr.bf16.mxu0 0
    %1356 = vmatpush1.bf16.msra.mxu0 %v237
    %1357 = vmatprep.subr.bf16.mxu0 0
    %1358 = vmatpush1.bf16.msra.mxu0 %v238
    %1359 = vmatprep.subr.bf16.mxu0 0
    %1360 = vmatpush1.bf16.msra.mxu0 %v239
    %1361 = vmatprep.subr.bf16.mxu0 0
    %1362 = vmatpush1.bf16.msra.mxu0 %v240
    %1363 = vmatprep.subr.bf16.mxu0 0
    %1364 = vmatpush1.bf16.msra.mxu0 0
    %1365 = vmatprep.subr.bf16.mxu0 0
    %1366 = vmatpush1.bf16.msra.mxu0 0
    %1367 = vmatprep.subr.bf16.mxu0 0
    %1368 = vmatpush1.bf16.msra.mxu0 0
    %1369 = vmatprep.subr.bf16.mxu0 0
    %1370 = vmatpush1.bf16.msra.mxu0 0
    %1371 = vmatprep.subr.bf16.mxu0 0
    %1372 = vmatpush1.bf16.msra.mxu0 0
    %1373 = vmatprep.subr.bf16.mxu0 0
    %1374 = vmatpush1.bf16.msra.mxu0 0
    %1375 = vmatprep.subr.bf16.mxu0 0
    %1376 = vmatpush1.bf16.msra.mxu0 0
    %1377 = vmatprep.subr.bf16.mxu0 0
    %1378 = vmatpush1.bf16.msra.mxu0 0
    %1379 = vmatprep.subr.bf16.mxu0 0
    %1380 = vmatpush1.bf16.msra.mxu0 0
    %1381 = vmatprep.subr.bf16.mxu0 0
    %1382 = vmatpush1.bf16.msra.mxu0 0
    %1383 = vmatprep.subr.bf16.mxu0 0
    %1384 = vmatpush1.bf16.msra.mxu0 0
    %1385 = vmatprep.subr.bf16.mxu0 0
    %1386 = vmatpush1.bf16.msra.mxu0 0
    %1387 = vmatprep.mubr.bf16.mxu0 0
    %1388 = vmatmul.mubr.bf16.gmra.mrb[0].mxu0 %v1353
    %v1389 = vpop.f32.mrb[0].mxu0
    %v1390 = vadd.f32 0.0, %v1389
    %v1391 = vpop.f32.mrb[0].mxu0
    %v1392 = vpop.f32.mrb[0].mxu0
    %v1393 = vpop.f32.mrb[0].mxu0
    %1394 = vdwg.mxu0
    %v1396 = vsel %vm174, %v1350, 0
    %1398 = vmatprep.subr.bf16.mxu0 0
    %1399 = vmatpush1.bf16.msra.mxu0 %v301
    %1400 = vmatprep.subr.bf16.mxu0 0
    %1401 = vmatpush1.bf16.msra.mxu0 %v302
    %1402 = vmatprep.subr.bf16.mxu0 0
    %1403 = vmatpush1.bf16.msra.mxu0 %v303
    %1404 = vmatprep.subr.bf16.mxu0 0
    %1405 = vmatpush1.bf16.msra.mxu0 %v304
    %1406 = vmatprep.subr.bf16.mxu0 0
    %1407 = vmatpush1.bf16.msra.mxu0 0
    %1408 = vmatprep.subr.bf16.mxu0 0
    %1409 = vmatpush1.bf16.msra.mxu0 0
    %1410 = vmatprep.subr.bf16.mxu0 0
    %1411 = vmatpush1.bf16.msra.mxu0 0
    %1412 = vmatprep.subr.bf16.mxu0 0
    %1413 = vmatpush1.bf16.msra.mxu0 0
    %1414 = vmatprep.subr.bf16.mxu0 0
    %1415 = vmatpush1.bf16.msra.mxu0 0
    %1416 = vmatprep.subr.bf16.mxu0 0
    %1417 = vmatpush1.bf16.msra.mxu0 0
    %1418 = vmatprep.subr.bf16.mxu0 0
    %1419 = vmatpush1.bf16.msra.mxu0 0
    %1420 = vmatprep.subr.bf16.mxu0 0
    %1421 = vmatpush1.bf16.msra.mxu0 0
    %1422 = vmatprep.subr.bf16.mxu0 0
    %1423 = vmatpush1.bf16.msra.mxu0 0
    %1424 = vmatprep.subr.bf16.mxu0 0
    %1425 = vmatpush1.bf16.msra.mxu0 0
    %1426 = vmatprep.subr.bf16.mxu0 0
    %1427 = vmatpush1.bf16.msra.mxu0 0
    %1428 = vmatprep.subr.bf16.mxu0 0
    %1429 = vmatpush1.bf16.msra.mxu0 0
    %1430 = vmatprep.mubr.bf16.mxu0 0
    %1431 = vmatmul.mubr.bf16.gmra.mrb[0].mxu0 %v1396
    %v1432 = vpop.f32.mrb[0].mxu0
    %v1433 = vadd.f32 %v1390, %v1432
    %v1434 = vpop.f32.mrb[0].mxu0
    %v1435 = vpop.f32.mrb[0].mxu0
    %v1436 = vpop.f32.mrb[0].mxu0
    %1437 = vdwg.mxu0
    %v1438 = vadd.f32 %v1433, %v67
    %v1439 = vtanh.pop %v1438
    %1440 = vmatprep.subr.bf16.mxu0 0
    %1441 = vmatpush1.bf16.msra.mxu0 %v166
    %1442 = vmatprep.subr.bf16.mxu0 0
    %1443 = vmatpush1.bf16.msra.mxu0 %v167
    %1444 = vmatprep.subr.bf16.mxu0 0
    %1445 = vmatpush1.bf16.msra.mxu0 %v168
    %1446 = vmatprep.subr.bf16.mxu0 0
    %1447 = vmatpush1.bf16.msra.mxu0 %v169
    %1448 = vmatprep.subr.bf16.mxu0 0
    %1449 = vmatpush1.bf16.msra.mxu0 0
    %1450 = vmatprep.subr.bf16.mxu0 0
    %1451 = vmatpush1.bf16.msra.mxu0 0
    %1452 = vmatprep.subr.bf16.mxu0 0
    %1453 = vmatpush1.bf16.msra.mxu0 0
    %1454 = vmatprep.subr.bf16.mxu0 0
    %1455 = vmatpush1.bf16.msra.mxu0 0
    %1456 = vmatprep.subr.bf16.mxu0 0
    %1457 = vmatpush1.bf16.msra.mxu0 0
    %1458 = vmatprep.subr.bf16.mxu0 0
    %1459 = vmatpush1.bf16.msra.mxu0 0
    %1460 = vmatprep.subr.bf16.mxu0 0
    %1461 = vmatpush1.bf16.msra.mxu0 0
    %1462 = vmatprep.subr.bf16.mxu0 0
    %1463 = vmatpush1.bf16.msra.mxu0 0
    %1464 = vmatprep.subr.bf16.mxu0 0
    %1465 = vmatpush1.bf16.msra.mxu0 0
    %1466 = vmatprep.subr.bf16.mxu0 0
    %1467 = vmatpush1.bf16.msra.mxu0 0
    %1468 = vmatprep.subr.bf16.mxu0 0
    %1469 = vmatpush1.bf16.msra.mxu0 0
    %1470 = vmatprep.subr.bf16.mxu0 0
    %1471 = vmatpush1.bf16.msra.mxu0 0
    %1472 = vmatprep.mubr.bf16.mxu0 0
    %1473 = vmatmul.mubr.bf16.gmra.mrb[0].mxu0 %v1396
    %v1474 = vpop.f32.mrb[0].mxu0
    %v1475 = vadd.f32 0.0, %v1474
    %v1476 = vpop.f32.mrb[0].mxu0
    %v1477 = vpop.f32.mrb[0].mxu0
    %v1478 = vpop.f32.mrb[0].mxu0
    %1479 = vdwg.mxu0
    %v1481 = vrot.slane %v1475, 6
    %v1483 = vadd.f32 %v144, %v1481
    %v1484 = vtanh.pop %v1483
    %v1485 = vpack.c.bf16 %v1484, %v1484
    %v1486 = vpack.c.bf16 %v1439, %v1439
    %v1488 = vsel %vm174, %v1486, 0
    %1490 = vmatprep.subr.bf16.mxu0 0
    %1491 = vmatpush1.bf16.msra.mxu0 %v237
    %1492 = vmatprep.subr.bf16.mxu0 0
    %1493 = vmatpush1.bf16.msra.mxu0 %v238
    %1494 = vmatprep.subr.bf16.mxu0 0
    %1495 = vmatpush1.bf16.msra.mxu0 %v239
    %1496 = vmatprep.subr.bf16.mxu0 0
    %1497 = vmatpush1.bf16.msra.mxu0 %v240
    %1498 = vmatprep.subr.bf16.mxu0 0
    %1499 = vmatpush1.bf16.msra.mxu0 0
    %1500 = vmatprep.subr.bf16.mxu0 0
    %1501 = vmatpush1.bf16.msra.mxu0 0
    %1502 = vmatprep.subr.bf16.mxu0 0
    %1503 = vmatpush1.bf16.msra.mxu0 0
    %1504 = vmatprep.subr.bf16.mxu0 0
    %1505 = vmatpush1.bf16.msra.mxu0 0
    %1506 = vmatprep.subr.bf16.mxu0 0
    %1507 = vmatpush1.bf16.msra.mxu0 0
    %1508 = vmatprep.subr.bf16.mxu0 0
    %1509 = vmatpush1.bf16.msra.mxu0 0
    %1510 = vmatprep.subr.bf16.mxu0 0
    %1511 = vmatpush1.bf16.msra.mxu0 0
    %1512 = vmatprep.subr.bf16.mxu0 0
    %1513 = vmatpush1.bf16.msra.mxu0 0
    %1514 = vmatprep.subr.bf16.mxu0 0
    %1515 = vmatpush1.bf16.msra.mxu0 0
    %1516 = vmatprep.subr.bf16.mxu0 0
    %1517 = vmatpush1.bf16.msra.mxu0 0
    %1518 = vmatprep.subr.bf16.mxu0 0
    %1519 = vmatpush1.bf16.msra.mxu0 0
    %1520 = vmatprep.subr.bf16.mxu0 0
    %1521 = vmatpush1.bf16.msra.mxu0 0
    %1522 = vmatprep.mubr.bf16.mxu0 0
    %1523 = vmatmul.mubr.bf16.gmra.mrb[0].mxu0 %v1488
    %v1524 = vpop.f32.mrb[0].mxu0
    %v1525 = vadd.f32 0.0, %v1524
    %v1526 = vpop.f32.mrb[0].mxu0
    %v1527 = vpop.f32.mrb[0].mxu0
    %v1528 = vpop.f32.mrb[0].mxu0
    %1529 = vdwg.mxu0
    %v1531 = vrot.slane %v1485, 1
    %v1533 = vsel %vm174, %v1531, 0
    %1535 = vmatprep.subr.bf16.mxu0 0
    %1536 = vmatpush1.bf16.msra.mxu0 %v301
    %1537 = vmatprep.subr.bf16.mxu0 0
    %1538 = vmatpush1.bf16.msra.mxu0 %v302
    %1539 = vmatprep.subr.bf16.mxu0 0
    %1540 = vmatpush1.bf16.msra.mxu0 %v303
    %1541 = vmatprep.subr.bf16.mxu0 0
    %1542 = vmatpush1.bf16.msra.mxu0 %v304
    %1543 = vmatprep.subr.bf16.mxu0 0
    %1544 = vmatpush1.bf16.msra.mxu0 0
    %1545 = vmatprep.subr.bf16.mxu0 0
    %1546 = vmatpush1.bf16.msra.mxu0 0
    %1547 = vmatprep.subr.bf16.mxu0 0
    %1548 = vmatpush1.bf16.msra.mxu0 0
    %1549 = vmatprep.subr.bf16.mxu0 0
    %1550 = vmatpush1.bf16.msra.mxu0 0
    %1551 = vmatprep.subr.bf16.mxu0 0
    %1552 = vmatpush1.bf16.msra.mxu0 0
    %1553 = vmatprep.subr.bf16.mxu0 0
    %1554 = vmatpush1.bf16.msra.mxu0 0
    %1555 = vmatprep.subr.bf16.mxu0 0
    %1556 = vmatpush1.bf16.msra.mxu0 0
    %1557 = vmatprep.subr.bf16.mxu0 0
    %1558 = vmatpush1.bf16.msra.mxu0 0
    %1559 = vmatprep.subr.bf16.mxu0 0
    %1560 = vmatpush1.bf16.msra.mxu0 0
    %1561 = vmatprep.subr.bf16.mxu0 0
    %1562 = vmatpush1.bf16.msra.mxu0 0
    %1563 = vmatprep.subr.bf16.mxu0 0
    %1564 = vmatpush1.bf16.msra.mxu0 0
    %1565 = vmatprep.subr.bf16.mxu0 0
    %1566 = vmatpush1.bf16.msra.mxu0 0
    %1567 = vmatprep.mubr.bf16.mxu0 0
    %1568 = vmatmul.mubr.bf16.gmra.mrb[0].mxu0 %v1533
    %v1569 = vpop.f32.mrb[0].mxu0
    %v1570 = vadd.f32 %v1525, %v1569
    %v1571 = vpop.f32.mrb[0].mxu0
    %v1572 = vpop.f32.mrb[0].mxu0
    %v1573 = vpop.f32.mrb[0].mxu0
    %1574 = vdwg.mxu0
    %v1575 = vadd.f32 %v1570, %v67
    %v1576 = vtanh.pop %v1575
    %1577 = vmatprep.subr.bf16.mxu0 0
    %1578 = vmatpush1.bf16.msra.mxu0 %v166
    %1579 = vmatprep.subr.bf16.mxu0 0
    %1580 = vmatpush1.bf16.msra.mxu0 %v167
    %1581 = vmatprep.subr.bf16.mxu0 0
    %1582 = vmatpush1.bf16.msra.mxu0 %v168
    %1583 = vmatprep.subr.bf16.mxu0 0
    %1584 = vmatpush1.bf16.msra.mxu0 %v169
    %1585 = vmatprep.subr.bf16.mxu0 0
    %1586 = vmatpush1.bf16.msra.mxu0 0
    %1587 = vmatprep.subr.bf16.mxu0 0
    %1588 = vmatpush1.bf16.msra.mxu0 0
    %1589 = vmatprep.subr.bf16.mxu0 0
    %1590 = vmatpush1.bf16.msra.mxu0 0
    %1591 = vmatprep.subr.bf16.mxu0 0
    %1592 = vmatpush1.bf16.msra.mxu0 0
    %1593 = vmatprep.subr.bf16.mxu0 0
    %1594 = vmatpush1.bf16.msra.mxu0 0
    %1595 = vmatprep.subr.bf16.mxu0 0
    %1596 = vmatpush1.bf16.msra.mxu0 0
    %1597 = vmatprep.subr.bf16.mxu0 0
    %1598 = vmatpush1.bf16.msra.mxu0 0
    %1599 = vmatprep.subr.bf16.mxu0 0
    %1600 = vmatpush1.bf16.msra.mxu0 0
    %1601 = vmatprep.subr.bf16.mxu0 0
    %1602 = vmatpush1.bf16.msra.mxu0 0
    %1603 = vmatprep.subr.bf16.mxu0 0
    %1604 = vmatpush1.bf16.msra.mxu0 0
    %1605 = vmatprep.subr.bf16.mxu0 0
    %1606 = vmatpush1.bf16.msra.mxu0 0
    %1607 = vmatprep.subr.bf16.mxu0 0
    %1608 = vmatpush1.bf16.msra.mxu0 0
    %1609 = vmatprep.mubr.bf16.mxu0 0
    %1610 = vmatmul.mubr.bf16.gmra.mrb[0].mxu0 %v1533
    %v1611 = vpop.f32.mrb[0].mxu0
    %v1612 = vadd.f32 0.0, %v1611
    %v1613 = vpop.f32.mrb[0].mxu0
    %v1614 = vpop.f32.mrb[0].mxu0
    %v1615 = vpop.f32.mrb[0].mxu0
    %1616 = vdwg.mxu0
    %v1618 = vrot.slane %v1612, 4
    %v1620 = vadd.f32 %v144, %v1618
    %v1621 = vtanh.pop %v1620
    %v1622 = vpack.c.bf16 %v1621, %v1621
    %v1623 = vpack.c.bf16 %v1576, %v1576
    %v1625 = vsel %vm174, %v1623, 0
    %1627 = vmatprep.subr.bf16.mxu0 0
    %1628 = vmatpush1.bf16.msra.mxu0 %v237
    %1629 = vmatprep.subr.bf16.mxu0 0
    %1630 = vmatpush1.bf16.msra.mxu0 %v238
    %1631 = vmatprep.subr.bf16.mxu0 0
    %1632 = vmatpush1.bf16.msra.mxu0 %v239
    %1633 = vmatprep.subr.bf16.mxu0 0
    %1634 = vmatpush1.bf16.msra.mxu0 %v240
    %1635 = vmatprep.subr.bf16.mxu0 0
    %1636 = vmatpush1.bf16.msra.mxu0 0
    %1637 = vmatprep.subr.bf16.mxu0 0
    %1638 = vmatpush1.bf16.msra.mxu0 0
    %1639 = vmatprep.subr.bf16.mxu0 0
    %1640 = vmatpush1.bf16.msra.mxu0 0
    %1641 = vmatprep.subr.bf16.mxu0 0
    %1642 = vmatpush1.bf16.msra.mxu0 0
    %1643 = vmatprep.subr.bf16.mxu0 0
    %1644 = vmatpush1.bf16.msra.mxu0 0
    %1645 = vmatprep.subr.bf16.mxu0 0
    %1646 = vmatpush1.bf16.msra.mxu0 0
    %1647 = vmatprep.subr.bf16.mxu0 0
    %1648 = vmatpush1.bf16.msra.mxu0 0
    %1649 = vmatprep.subr.bf16.mxu0 0
    %1650 = vmatpush1.bf16.msra.mxu0 0
    %1651 = vmatprep.subr.bf16.mxu0 0
    %1652 = vmatpush1.bf16.msra.mxu0 0
    %1653 = vmatprep.subr.bf16.mxu0 0
    %1654 = vmatpush1.bf16.msra.mxu0 0
    %1655 = vmatprep.subr.bf16.mxu0 0
    %1656 = vmatpush1.bf16.msra.mxu0 0
    %1657 = vmatprep.subr.bf16.mxu0 0
    %1658 = vmatpush1.bf16.msra.mxu0 0
    %1659 = vmatprep.mubr.bf16.mxu0 0
    %1660 = vmatmul.mubr.bf16.gmra.mrb[0].mxu0 %v1625
    %v1661 = vpop.f32.mrb[0].mxu0
    %v1662 = vadd.f32 0.0, %v1661
    %v1663 = vpop.f32.mrb[0].mxu0
    %v1664 = vpop.f32.mrb[0].mxu0
    %v1665 = vpop.f32.mrb[0].mxu0
    %1666 = vdwg.mxu0
    %v1668 = vrot.slane %v1622, 2
    %v1670 = vsel %vm174, %v1668, 0
    %1672 = vmatprep.subr.bf16.mxu0 0
    %1673 = vmatpush1.bf16.msra.mxu0 %v301
    %1674 = vmatprep.subr.bf16.mxu0 0
    %1675 = vmatpush1.bf16.msra.mxu0 %v302
    %1676 = vmatprep.subr.bf16.mxu0 0
    %1677 = vmatpush1.bf16.msra.mxu0 %v303
    %1678 = vmatprep.subr.bf16.mxu0 0
    %1679 = vmatpush1.bf16.msra.mxu0 %v304
    %1680 = vmatprep.subr.bf16.mxu0 0
    %1681 = vmatpush1.bf16.msra.mxu0 0
    %1682 = vmatprep.subr.bf16.mxu0 0
    %1683 = vmatpush1.bf16.msra.mxu0 0
    %1684 = vmatprep.subr.bf16.mxu0 0
    %1685 = vmatpush1.bf16.msra.mxu0 0
    %1686 = vmatprep.subr.bf16.mxu0 0
    %1687 = vmatpush1.bf16.msra.mxu0 0
    %1688 = vmatprep.subr.bf16.mxu0 0
    %1689 = vmatpush1.bf16.msra.mxu0 0
    %1690 = vmatprep.subr.bf16.mxu0 0
    %1691 = vmatpush1.bf16.msra.mxu0 0
    %1692 = vmatprep.subr.bf16.mxu0 0
    %1693 = vmatpush1.bf16.msra.mxu0 0
    %1694 = vmatprep.subr.bf16.mxu0 0
    %1695 = vmatpush1.bf16.msra.mxu0 0
    %1696 = vmatprep.subr.bf16.mxu0 0
    %1697 = vmatpush1.bf16.msra.mxu0 0
    %1698 = vmatprep.subr.bf16.mxu0 0
    %1699 = vmatpush1.bf16.msra.mxu0 0
    %1700 = vmatprep.subr.bf16.mxu0 0
    %1701 = vmatpush1.bf16.msra.mxu0 0
    %1702 = vmatprep.subr.bf16.mxu0 0
    %1703 = vmatpush1.bf16.msra.mxu0 0
    %1704 = vmatprep.mubr.bf16.mxu0 0
    %1705 = vmatmul.mubr.bf16.gmra.mrb[0].mxu0 %v1670
    %v1706 = vpop.f32.mrb[0].mxu0
    %v1707 = vadd.f32 %v1662, %v1706
    %v1708 = vpop.f32.mrb[0].mxu0
    %v1709 = vpop.f32.mrb[0].mxu0
    %v1710 = vpop.f32.mrb[0].mxu0
    %1711 = vdwg.mxu0
    %v1712 = vadd.f32 %v1707, %v67
    %v1713 = vtanh.pop %v1712
    %1714 = vmatprep.subr.bf16.mxu0 0
    %1715 = vmatpush1.bf16.msra.mxu0 %v166
    %1716 = vmatprep.subr.bf16.mxu0 0
    %1717 = vmatpush1.bf16.msra.mxu0 %v167
    %1718 = vmatprep.subr.bf16.mxu0 0
    %1719 = vmatpush1.bf16.msra.mxu0 %v168
    %1720 = vmatprep.subr.bf16.mxu0 0
    %1721 = vmatpush1.bf16.msra.mxu0 %v169
    %1722 = vmatprep.subr.bf16.mxu0 0
    %1723 = vmatpush1.bf16.msra.mxu0 0
    %1724 = vmatprep.subr.bf16.mxu0 0
    %1725 = vmatpush1.bf16.msra.mxu0 0
    %1726 = vmatprep.subr.bf16.mxu0 0
    %1727 = vmatpush1.bf16.msra.mxu0 0
    %1728 = vmatprep.subr.bf16.mxu0 0
    %1729 = vmatpush1.bf16.msra.mxu0 0
    %1730 = vmatprep.subr.bf16.mxu0 0
    %1731 = vmatpush1.bf16.msra.mxu0 0
    %1732 = vmatprep.subr.bf16.mxu0 0
    %1733 = vmatpush1.bf16.msra.mxu0 0
    %1734 = vmatprep.subr.bf16.mxu0 0
    %1735 = vmatpush1.bf16.msra.mxu0 0
    %1736 = vmatprep.subr.bf16.mxu0 0
    %1737 = vmatpush1.bf16.msra.mxu0 0
    %1738 = vmatprep.subr.bf16.mxu0 0
    %1739 = vmatpush1.bf16.msra.mxu0 0
    %1740 = vmatprep.subr.bf16.mxu0 0
    %1741 = vmatpush1.bf16.msra.mxu0 0
    %1742 = vmatprep.subr.bf16.mxu0 0
    %1743 = vmatpush1.bf16.msra.mxu0 0
    %1744 = vmatprep.subr.bf16.mxu0 0
    %1745 = vmatpush1.bf16.msra.mxu0 0
    %1746 = vmatprep.mubr.bf16.mxu0 0
    %1747 = vmatmul.mubr.bf16.gmra.mrb[0].mxu0 %v1670
    %v1748 = vpop.f32.mrb[0].mxu0
    %v1749 = vadd.f32 0.0, %v1748
    %v1750 = vpop.f32.mrb[0].mxu0
    %v1751 = vpop.f32.mrb[0].mxu0
    %v1752 = vpop.f32.mrb[0].mxu0
    %1753 = vdwg.mxu0
    %v1755 = vrot.slane %v1749, 2
    %v1757 = vadd.f32 %v144, %v1755
    %v1758 = vtanh.pop %v1757
    %v1759 = vpack.c.bf16 %v1758, %v1758
    %v1760 = vpack.c.bf16 %v1713, %v1713
    %v1762 = vsel %vm174, %v1760, 0
    %1764 = vmatprep.subr.bf16.mxu0 0
    %1765 = vmatpush1.bf16.msra.mxu0 %v237
    %1766 = vmatprep.subr.bf16.mxu0 0
    %1767 = vmatpush1.bf16.msra.mxu0 %v238
    %1768 = vmatprep.subr.bf16.mxu0 0
    %1769 = vmatpush1.bf16.msra.mxu0 %v239
    %1770 = vmatprep.subr.bf16.mxu0 0
    %1771 = vmatpush1.bf16.msra.mxu0 %v240
    %1772 = vmatprep.subr.bf16.mxu0 0
    %1773 = vmatpush1.bf16.msra.mxu0 0
    %1774 = vmatprep.subr.bf16.mxu0 0
    %1775 = vmatpush1.bf16.msra.mxu0 0
    %1776 = vmatprep.subr.bf16.mxu0 0
    %1777 = vmatpush1.bf16.msra.mxu0 0
    %1778 = vmatprep.subr.bf16.mxu0 0
    %1779 = vmatpush1.bf16.msra.mxu0 0
    %1780 = vmatprep.subr.bf16.mxu0 0
    %1781 = vmatpush1.bf16.msra.mxu0 0
    %1782 = vmatprep.subr.bf16.mxu0 0
    %1783 = vmatpush1.bf16.msra.mxu0 0
    %1784 = vmatprep.subr.bf16.mxu0 0
    %1785 = vmatpush1.bf16.msra.mxu0 0
    %1786 = vmatprep.subr.bf16.mxu0 0
    %1787 = vmatpush1.bf16.msra.mxu0 0
    %1788 = vmatprep.subr.bf16.mxu0 0
    %1789 = vmatpush1.bf16.msra.mxu0 0
    %1790 = vmatprep.subr.bf16.mxu0 0
    %1791 = vmatpush1.bf16.msra.mxu0 0
    %1792 = vmatprep.subr.bf16.mxu0 0
    %1793 = vmatpush1.bf16.msra.mxu0 0
    %1794 = vmatprep.subr.bf16.mxu0 0
    %1795 = vmatpush1.bf16.msra.mxu0 0
    %1796 = vmatprep.mubr.bf16.mxu0 0
    %1797 = vmatmul.mubr.bf16.gmra.mrb[0].mxu0 %v1762
    %v1798 = vpop.f32.mrb[0].mxu0
    %v1799 = vadd.f32 0.0, %v1798
    %v1800 = vpop.f32.mrb[0].mxu0
    %v1801 = vpop.f32.mrb[0].mxu0
    %v1802 = vpop.f32.mrb[0].mxu0
    %1803 = vdwg.mxu0
    %v1805 = vrot.slane %v1759, 3
    %v1807 = vsel %vm174, %v1805, 0
    %1809 = vmatprep.subr.bf16.mxu0 0
    %1810 = vmatpush1.bf16.msra.mxu0 %v301
    %1811 = vmatprep.subr.bf16.mxu0 0
    %1812 = vmatpush1.bf16.msra.mxu0 %v302
    %1813 = vmatprep.subr.bf16.mxu0 0
    %1814 = vmatpush1.bf16.msra.mxu0 %v303
    %1815 = vmatprep.subr.bf16.mxu0 0
    %1816 = vmatpush1.bf16.msra.mxu0 %v304
    %1817 = vmatprep.subr.bf16.mxu0 0
    %1818 = vmatpush1.bf16.msra.mxu0 0
    %1819 = vmatprep.subr.bf16.mxu0 0
    %1820 = vmatpush1.bf16.msra.mxu0 0
    %1821 = vmatprep.subr.bf16.mxu0 0
    %1822 = vmatpush1.bf16.msra.mxu0 0
    %1823 = vmatprep.subr.bf16.mxu0 0
    %1824 = vmatpush1.bf16.msra.mxu0 0
    %1825 = vmatprep.subr.bf16.mxu0 0
    %1826 = vmatpush1.bf16.msra.mxu0 0
    %1827 = vmatprep.subr.bf16.mxu0 0
    %1828 = vmatpush1.bf16.msra.mxu0 0
    %1829 = vmatprep.subr.bf16.mxu0 0
    %1830 = vmatpush1.bf16.msra.mxu0 0
    %1831 = vmatprep.subr.bf16.mxu0 0
    %1832 = vmatpush1.bf16.msra.mxu0 0
    %1833 = vmatprep.subr.bf16.mxu0 0
    %1834 = vmatpush1.bf16.msra.mxu0 0
    %1835 = vmatprep.subr.bf16.mxu0 0
    %1836 = vmatpush1.bf16.msra.mxu0 0
    %1837 = vmatprep.subr.bf16.mxu0 0
    %1838 = vmatpush1.bf16.msra.mxu0 0
    %1839 = vmatprep.subr.bf16.mxu0 0
    %1840 = vmatpush1.bf16.msra.mxu0 0
    %1841 = vmatprep.mubr.bf16.mxu0 0
    %1842 = vmatmul.mubr.bf16.gmra.mrb[0].mxu0 %v1807
    %v1843 = vpop.f32.mrb[0].mxu0
    %v1844 = vadd.f32 %v1799, %v1843
    %v1845 = vpop.f32.mrb[0].mxu0
    %v1846 = vpop.f32.mrb[0].mxu0
    %v1847 = vpop.f32.mrb[0].mxu0
    %1848 = vdwg.mxu0
    %v1849 = vadd.f32 %v1844, %v67
    %v1850 = vtanh.pop %v1849
    %1851 = vmatprep.subr.bf16.mxu0 0
    %1852 = vmatpush1.bf16.msra.mxu0 %v166
    %1853 = vmatprep.subr.bf16.mxu0 0
    %1854 = vmatpush1.bf16.msra.mxu0 %v167
    %1855 = vmatprep.subr.bf16.mxu0 0
    %1856 = vmatpush1.bf16.msra.mxu0 %v168
    %1857 = vmatprep.subr.bf16.mxu0 0
    %1858 = vmatpush1.bf16.msra.mxu0 %v169
    %1859 = vmatprep.subr.bf16.mxu0 0
    %1860 = vmatpush1.bf16.msra.mxu0 0
    %1861 = vmatprep.subr.bf16.mxu0 0
    %1862 = vmatpush1.bf16.msra.mxu0 0
    %1863 = vmatprep.subr.bf16.mxu0 0
    %1864 = vmatpush1.bf16.msra.mxu0 0
    %1865 = vmatprep.subr.bf16.mxu0 0
    %1866 = vmatpush1.bf16.msra.mxu0 0
    %1867 = vmatprep.subr.bf16.mxu0 0
    %1868 = vmatpush1.bf16.msra.mxu0 0
    %1869 = vmatprep.subr.bf16.mxu0 0
    %1870 = vmatpush1.bf16.msra.mxu0 0
    %1871 = vmatprep.subr.bf16.mxu0 0
    %1872 = vmatpush1.bf16.msra.mxu0 0
    %1873 = vmatprep.subr.bf16.mxu0 0
    %1874 = vmatpush1.bf16.msra.mxu0 0
    %1875 = vmatprep.subr.bf16.mxu0 0
    %1876 = vmatpush1.bf16.msra.mxu0 0
    %1877 = vmatprep.subr.bf16.mxu0 0
    %1878 = vmatpush1.bf16.msra.mxu0 0
    %1879 = vmatprep.subr.bf16.mxu0 0
    %1880 = vmatpush1.bf16.msra.mxu0 0
    %1881 = vmatprep.subr.bf16.mxu0 0
    %1882 = vmatpush1.bf16.msra.mxu0 0
    %1883 = vmatprep.mubr.bf16.mxu0 0
    %1884 = vmatmul.mubr.bf16.gmra.mrb[0].mxu0 %v1807
    %v1885 = vpop.f32.mrb[0].mxu0
    %v1886 = vadd.f32 0.0, %v1885
    %v1887 = vpop.f32.mrb[0].mxu0
    %v1888 = vpop.f32.mrb[0].mxu0
    %v1889 = vpop.f32.mrb[0].mxu0
    %1890 = vdwg.mxu0
    %v1891 = vadd.f32 %v147, %v1886
    %v1892 = vtanh.pop %v1891
    %v1893 = vpack.c.bf16 %v1892, %v1892
    %v1894 = vpack.c.bf16 %v1850, %v1850
    %v1896 = vsel %vm174, %v1894, 0
    %1898 = vmatprep.subr.bf16.mxu0 0
    %1899 = vmatpush1.bf16.msra.mxu0 %v237
    %1900 = vmatprep.subr.bf16.mxu0 0
    %1901 = vmatpush1.bf16.msra.mxu0 %v238
    %1902 = vmatprep.subr.bf16.mxu0 0
    %1903 = vmatpush1.bf16.msra.mxu0 %v239
    %1904 = vmatprep.subr.bf16.mxu0 0
    %1905 = vmatpush1.bf16.msra.mxu0 %v240
    %1906 = vmatprep.subr.bf16.mxu0 0
    %1907 = vmatpush1.bf16.msra.mxu0 0
    %1908 = vmatprep.subr.bf16.mxu0 0
    %1909 = vmatpush1.bf16.msra.mxu0 0
    %1910 = vmatprep.subr.bf16.mxu0 0
    %1911 = vmatpush1.bf16.msra.mxu0 0
    %1912 = vmatprep.subr.bf16.mxu0 0
    %1913 = vmatpush1.bf16.msra.mxu0 0
    %1914 = vmatprep.subr.bf16.mxu0 0
    %1915 = vmatpush1.bf16.msra.mxu0 0
    %1916 = vmatprep.subr.bf16.mxu0 0
    %1917 = vmatpush1.bf16.msra.mxu0 0
    %1918 = vmatprep.subr.bf16.mxu0 0
    %1919 = vmatpush1.bf16.msra.mxu0 0
    %1920 = vmatprep.subr.bf16.mxu0 0
    %1921 = vmatpush1.bf16.msra.mxu0 0
    %1922 = vmatprep.subr.bf16.mxu0 0
    %1923 = vmatpush1.bf16.msra.mxu0 0
    %1924 = vmatprep.subr.bf16.mxu0 0
    %1925 = vmatpush1.bf16.msra.mxu0 0
    %1926 = vmatprep.subr.bf16.mxu0 0
    %1927 = vmatpush1.bf16.msra.mxu0 0
    %1928 = vmatprep.subr.bf16.mxu0 0
    %1929 = vmatpush1.bf16.msra.mxu0 0
    %1930 = vmatprep.mubr.bf16.mxu0 0
    %1931 = vmatmul.mubr.bf16.gmra.mrb[0].mxu0 %v1896
    %v1932 = vpop.f32.mrb[0].mxu0
    %v1933 = vadd.f32 0.0, %v1932
    %v1934 = vpop.f32.mrb[0].mxu0
    %v1935 = vpop.f32.mrb[0].mxu0
    %v1936 = vpop.f32.mrb[0].mxu0
    %1937 = vdwg.mxu0
    %v1939 = vsel %vm174, %v1893, 0
    %1941 = vmatprep.subr.bf16.mxu0 0
    %1942 = vmatpush1.bf16.msra.mxu0 %v301
    %1943 = vmatprep.subr.bf16.mxu0 0
    %1944 = vmatpush1.bf16.msra.mxu0 %v302
    %1945 = vmatprep.subr.bf16.mxu0 0
    %1946 = vmatpush1.bf16.msra.mxu0 %v303
    %1947 = vmatprep.subr.bf16.mxu0 0
    %1948 = vmatpush1.bf16.msra.mxu0 %v304
    %1949 = vmatprep.subr.bf16.mxu0 0
    %1950 = vmatpush1.bf16.msra.mxu0 0
    %1951 = vmatprep.subr.bf16.mxu0 0
    %1952 = vmatpush1.bf16.msra.mxu0 0
    %1953 = vmatprep.subr.bf16.mxu0 0
    %1954 = vmatpush1.bf16.msra.mxu0 0
    %1955 = vmatprep.subr.bf16.mxu0 0
    %1956 = vmatpush1.bf16.msra.mxu0 0
    %1957 = vmatprep.subr.bf16.mxu0 0
    %1958 = vmatpush1.bf16.msra.mxu0 0
    %1959 = vmatprep.subr.bf16.mxu0 0
    %1960 = vmatpush1.bf16.msra.mxu0 0
    %1961 = vmatprep.subr.bf16.mxu0 0
    %1962 = vmatpush1.bf16.msra.mxu0 0
    %1963 = vmatprep.subr.bf16.mxu0 0
    %1964 = vmatpush1.bf16.msra.mxu0 0
    %1965 = vmatprep.subr.bf16.mxu0 0
    %1966 = vmatpush1.bf16.msra.mxu0 0
    %1967 = vmatprep.subr.bf16.mxu0 0
    %1968 = vmatpush1.bf16.msra.mxu0 0
    %1969 = vmatprep.subr.bf16.mxu0 0
    %1970 = vmatpush1.bf16.msra.mxu0 0
    %1971 = vmatprep.subr.bf16.mxu0 0
    %1972 = vmatpush1.bf16.msra.mxu0 0
    %1973 = vmatprep.mubr.bf16.mxu0 0
    %1974 = vmatmul.mubr.bf16.gmra.mrb[0].mxu0 %v1939
    %v1975 = vpop.f32.mrb[0].mxu0
    %v1976 = vadd.f32 %v1933, %v1975
    %v1977 = vpop.f32.mrb[0].mxu0
    %v1978 = vpop.f32.mrb[0].mxu0
    %v1979 = vpop.f32.mrb[0].mxu0
    %1980 = vdwg.mxu0
    %v1981 = vadd.f32 %v1976, %v67
    %v1982 = vtanh.pop %v1981
    %1983 = vmatprep.subr.bf16.mxu0 0
    %1984 = vmatpush1.bf16.msra.mxu0 %v166
    %1985 = vmatprep.subr.bf16.mxu0 0
    %1986 = vmatpush1.bf16.msra.mxu0 %v167
    %1987 = vmatprep.subr.bf16.mxu0 0
    %1988 = vmatpush1.bf16.msra.mxu0 %v168
    %1989 = vmatprep.subr.bf16.mxu0 0
    %1990 = vmatpush1.bf16.msra.mxu0 %v169
    %1991 = vmatprep.subr.bf16.mxu0 0
    %1992 = vmatpush1.bf16.msra.mxu0 0
    %1993 = vmatprep.subr.bf16.mxu0 0
    %1994 = vmatpush1.bf16.msra.mxu0 0
    %1995 = vmatprep.subr.bf16.mxu0 0
    %1996 = vmatpush1.bf16.msra.mxu0 0
    %1997 = vmatprep.subr.bf16.mxu0 0
    %1998 = vmatpush1.bf16.msra.mxu0 0
    %1999 = vmatprep.subr.bf16.mxu0 0
    %2000 = vmatpush1.bf16.msra.mxu0 0
    %2001 = vmatprep.subr.bf16.mxu0 0
    %2002 = vmatpush1.bf16.msra.mxu0 0
    %2003 = vmatprep.subr.bf16.mxu0 0
    %2004 = vmatpush1.bf16.msra.mxu0 0
    %2005 = vmatprep.subr.bf16.mxu0 0
    %2006 = vmatpush1.bf16.msra.mxu0 0
    %2007 = vmatprep.subr.bf16.mxu0 0
    %2008 = vmatpush1.bf16.msra.mxu0 0
    %2009 = vmatprep.subr.bf16.mxu0 0
    %2010 = vmatpush1.bf16.msra.mxu0 0
    %2011 = vmatprep.subr.bf16.mxu0 0
    %2012 = vmatpush1.bf16.msra.mxu0 0
    %2013 = vmatprep.subr.bf16.mxu0 0
    %2014 = vmatpush1.bf16.msra.mxu0 0
    %2015 = vmatprep.mubr.bf16.mxu0 0
    %2016 = vmatmul.mubr.bf16.gmra.mrb[0].mxu0 %v1939
    %v2017 = vpop.f32.mrb[0].mxu0
    %v2018 = vadd.f32 0.0, %v2017
    %v2019 = vpop.f32.mrb[0].mxu0
    %v2020 = vpop.f32.mrb[0].mxu0
    %v2021 = vpop.f32.mrb[0].mxu0
    %2022 = vdwg.mxu0
    %v2024 = vrot.slane %v2018, 6
    %v2026 = vadd.f32 %v147, %v2024
    %v2027 = vtanh.pop %v2026
    %v2028 = vpack.c.bf16 %v2027, %v2027
    %v2029 = vpack.c.bf16 %v1982, %v1982
    %v2031 = vsel %vm174, %v2029, 0
    %2033 = vmatprep.subr.bf16.mxu0 0
    %2034 = vmatpush1.bf16.msra.mxu0 %v237
    %2035 = vmatprep.subr.bf16.mxu0 0
    %2036 = vmatpush1.bf16.msra.mxu0 %v238
    %2037 = vmatprep.subr.bf16.mxu0 0
    %2038 = vmatpush1.bf16.msra.mxu0 %v239
    %2039 = vmatprep.subr.bf16.mxu0 0
    %2040 = vmatpush1.bf16.msra.mxu0 %v240
    %2041 = vmatprep.subr.bf16.mxu0 0
    %2042 = vmatpush1.bf16.msra.mxu0 0
    %2043 = vmatprep.subr.bf16.mxu0 0
    %2044 = vmatpush1.bf16.msra.mxu0 0
    %2045 = vmatprep.subr.bf16.mxu0 0
    %2046 = vmatpush1.bf16.msra.mxu0 0
    %2047 = vmatprep.subr.bf16.mxu0 0
    %2048 = vmatpush1.bf16.msra.mxu0 0
    %2049 = vmatprep.subr.bf16.mxu0 0
    %2050 = vmatpush1.bf16.msra.mxu0 0
    %2051 = vmatprep.subr.bf16.mxu0 0
    %2052 = vmatpush1.bf16.msra.mxu0 0
    %2053 = vmatprep.subr.bf16.mxu0 0
    %2054 = vmatpush1.bf16.msra.mxu0 0
    %2055 = vmatprep.subr.bf16.mxu0 0
    %2056 = vmatpush1.bf16.msra.mxu0 0
    %2057 = vmatprep.subr.bf16.mxu0 0
    %2058 = vmatpush1.bf16.msra.mxu0 0
    %2059 = vmatprep.subr.bf16.mxu0 0
    %2060 = vmatpush1.bf16.msra.mxu0 0
    %2061 = vmatprep.subr.bf16.mxu0 0
    %2062 = vmatpush1.bf16.msra.mxu0 0
    %2063 = vmatprep.subr.bf16.mxu0 0
    %2064 = vmatpush1.bf16.msra.mxu0 0
    %2065 = vmatprep.mubr.bf16.mxu0 0
    %2066 = vmatmul.mubr.bf16.gmra.mrb[0].mxu0 %v2031
    %v2067 = vpop.f32.mrb[0].mxu0
    %v2068 = vadd.f32 0.0, %v2067
    %v2069 = vpop.f32.mrb[0].mxu0
    %v2070 = vpop.f32.mrb[0].mxu0
    %v2071 = vpop.f32.mrb[0].mxu0
    %2072 = vdwg.mxu0
    %v2074 = vrot.slane %v2028, 1
    %v2076 = vsel %vm174, %v2074, 0
    %2078 = vmatprep.subr.bf16.mxu0 0
    %2079 = vmatpush1.bf16.msra.mxu0 %v301
    %2080 = vmatprep.subr.bf16.mxu0 0
    %2081 = vmatpush1.bf16.msra.mxu0 %v302
    %2082 = vmatprep.subr.bf16.mxu0 0
    %2083 = vmatpush1.bf16.msra.mxu0 %v303
    %2084 = vmatprep.subr.bf16.mxu0 0
    %2085 = vmatpush1.bf16.msra.mxu0 %v304
    %2086 = vmatprep.subr.bf16.mxu0 0
    %2087 = vmatpush1.bf16.msra.mxu0 0
    %2088 = vmatprep.subr.bf16.mxu0 0
    %2089 = vmatpush1.bf16.msra.mxu0 0
    %2090 = vmatprep.subr.bf16.mxu0 0
    %2091 = vmatpush1.bf16.msra.mxu0 0
    %2092 = vmatprep.subr.bf16.mxu0 0
    %2093 = vmatpush1.bf16.msra.mxu0 0
    %2094 = vmatprep.subr.bf16.mxu0 0
    %2095 = vmatpush1.bf16.msra.mxu0 0
    %2096 = vmatprep.subr.bf16.mxu0 0
    %2097 = vmatpush1.bf16.msra.mxu0 0
    %2098 = vmatprep.subr.bf16.mxu0 0
    %2099 = vmatpush1.bf16.msra.mxu0 0
    %2100 = vmatprep.subr.bf16.mxu0 0
    %2101 = vmatpush1.bf16.msra.mxu0 0
    %2102 = vmatprep.subr.bf16.mxu0 0
    %2103 = vmatpush1.bf16.msra.mxu0 0
    %2104 = vmatprep.subr.bf16.mxu0 0
    %2105 = vmatpush1.bf16.msra.mxu0 0
    %2106 = vmatprep.subr.bf16.mxu0 0
    %2107 = vmatpush1.bf16.msra.mxu0 0
    %2108 = vmatprep.subr.bf16.mxu0 0
    %2109 = vmatpush1.bf16.msra.mxu0 0
    %2110 = vmatprep.mubr.bf16.mxu0 0
    %2111 = vmatmul.mubr.bf16.gmra.mrb[0].mxu0 %v2076
    %v2112 = vpop.f32.mrb[0].mxu0
    %v2113 = vadd.f32 %v2068, %v2112
    %v2114 = vpop.f32.mrb[0].mxu0
    %v2115 = vpop.f32.mrb[0].mxu0
    %v2116 = vpop.f32.mrb[0].mxu0
    %2117 = vdwg.mxu0
    %v2118 = vadd.f32 %v2113, %v67
    %v2119 = vtanh.pop %v2118
    %2120 = vmatprep.subr.bf16.mxu0 0
    %2121 = vmatpush1.bf16.msra.mxu0 %v166
    %2122 = vmatprep.subr.bf16.mxu0 0
    %2123 = vmatpush1.bf16.msra.mxu0 %v167
    %2124 = vmatprep.subr.bf16.mxu0 0
    %2125 = vmatpush1.bf16.msra.mxu0 %v168
    %2126 = vmatprep.subr.bf16.mxu0 0
    %2127 = vmatpush1.bf16.msra.mxu0 %v169
    %2128 = vmatprep.subr.bf16.mxu0 0
    %2129 = vmatpush1.bf16.msra.mxu0 0
    %2130 = vmatprep.subr.bf16.mxu0 0
    %2131 = vmatpush1.bf16.msra.mxu0 0
    %2132 = vmatprep.subr.bf16.mxu0 0
    %2133 = vmatpush1.bf16.msra.mxu0 0
    %2134 = vmatprep.subr.bf16.mxu0 0
    %2135 = vmatpush1.bf16.msra.mxu0 0
    %2136 = vmatprep.subr.bf16.mxu0 0
    %2137 = vmatpush1.bf16.msra.mxu0 0
    %2138 = vmatprep.subr.bf16.mxu0 0
    %2139 = vmatpush1.bf16.msra.mxu0 0
    %2140 = vmatprep.subr.bf16.mxu0 0
    %2141 = vmatpush1.bf16.msra.mxu0 0
    %2142 = vmatprep.subr.bf16.mxu0 0
    %2143 = vmatpush1.bf16.msra.mxu0 0
    %2144 = vmatprep.subr.bf16.mxu0 0
    %2145 = vmatpush1.bf16.msra.mxu0 0
    %2146 = vmatprep.subr.bf16.mxu0 0
    %2147 = vmatpush1.bf16.msra.mxu0 0
    %2148 = vmatprep.subr.bf16.mxu0 0
    %2149 = vmatpush1.bf16.msra.mxu0 0
    %2150 = vmatprep.subr.bf16.mxu0 0
    %2151 = vmatpush1.bf16.msra.mxu0 0
    %2152 = vmatprep.mubr.bf16.mxu0 0
    %2153 = vmatmul.mubr.bf16.gmra.mrb[0].mxu0 %v2076
    %v2154 = vpop.f32.mrb[0].mxu0
    %v2155 = vadd.f32 0.0, %v2154
    %v2156 = vpop.f32.mrb[0].mxu0
    %v2157 = vpop.f32.mrb[0].mxu0
    %v2158 = vpop.f32.mrb[0].mxu0
    %2159 = vdwg.mxu0
    %v2161 = vrot.slane %v2155, 4
    %v2163 = vadd.f32 %v147, %v2161
    %v2164 = vtanh.pop %v2163
    %v2165 = vpack.c.bf16 %v2164, %v2164
    %v2166 = vpack.c.bf16 %v2119, %v2119
    %v2168 = vsel %vm174, %v2166, 0
    %2170 = vmatprep.subr.bf16.mxu0 0
    %2171 = vmatpush1.bf16.msra.mxu0 %v237
    %2172 = vmatprep.subr.bf16.mxu0 0
    %2173 = vmatpush1.bf16.msra.mxu0 %v238
    %2174 = vmatprep.subr.bf16.mxu0 0
    %2175 = vmatpush1.bf16.msra.mxu0 %v239
    %2176 = vmatprep.subr.bf16.mxu0 0
    %2177 = vmatpush1.bf16.msra.mxu0 %v240
    %2178 = vmatprep.subr.bf16.mxu0 0
    %2179 = vmatpush1.bf16.msra.mxu0 0
    %2180 = vmatprep.subr.bf16.mxu0 0
    %2181 = vmatpush1.bf16.msra.mxu0 0
    %2182 = vmatprep.subr.bf16.mxu0 0
    %2183 = vmatpush1.bf16.msra.mxu0 0
    %2184 = vmatprep.subr.bf16.mxu0 0
    %2185 = vmatpush1.bf16.msra.mxu0 0
    %2186 = vmatprep.subr.bf16.mxu0 0
    %2187 = vmatpush1.bf16.msra.mxu0 0
    %2188 = vmatprep.subr.bf16.mxu0 0
    %2189 = vmatpush1.bf16.msra.mxu0 0
    %2190 = vmatprep.subr.bf16.mxu0 0
    %2191 = vmatpush1.bf16.msra.mxu0 0
    %2192 = vmatprep.subr.bf16.mxu0 0
    %2193 = vmatpush1.bf16.msra.mxu0 0
    %2194 = vmatprep.subr.bf16.mxu0 0
    %2195 = vmatpush1.bf16.msra.mxu0 0
    %2196 = vmatprep.subr.bf16.mxu0 0
    %2197 = vmatpush1.bf16.msra.mxu0 0
    %2198 = vmatprep.subr.bf16.mxu0 0
    %2199 = vmatpush1.bf16.msra.mxu0 0
    %2200 = vmatprep.subr.bf16.mxu0 0
    %2201 = vmatpush1.bf16.msra.mxu0 0
    %2202 = vmatprep.mubr.bf16.mxu0 0
    %2203 = vmatmul.mubr.bf16.gmra.mrb[0].mxu0 %v2168
    %v2204 = vpop.f32.mrb[0].mxu0
    %v2205 = vadd.f32 0.0, %v2204
    %v2206 = vpop.f32.mrb[0].mxu0
    %v2207 = vpop.f32.mrb[0].mxu0
    %v2208 = vpop.f32.mrb[0].mxu0
    %2209 = vdwg.mxu0
    %v2211 = vrot.slane %v2165, 2
    %v2213 = vsel %vm174, %v2211, 0
    %2215 = vmatprep.subr.bf16.mxu0 0
    %2216 = vmatpush1.bf16.msra.mxu0 %v301
    %2217 = vmatprep.subr.bf16.mxu0 0
    %2218 = vmatpush1.bf16.msra.mxu0 %v302
    %2219 = vmatprep.subr.bf16.mxu0 0
    %2220 = vmatpush1.bf16.msra.mxu0 %v303
    %2221 = vmatprep.subr.bf16.mxu0 0
    %2222 = vmatpush1.bf16.msra.mxu0 %v304
    %2223 = vmatprep.subr.bf16.mxu0 0
    %2224 = vmatpush1.bf16.msra.mxu0 0
    %2225 = vmatprep.subr.bf16.mxu0 0
    %2226 = vmatpush1.bf16.msra.mxu0 0
    %2227 = vmatprep.subr.bf16.mxu0 0
    %2228 = vmatpush1.bf16.msra.mxu0 0
    %2229 = vmatprep.subr.bf16.mxu0 0
    %2230 = vmatpush1.bf16.msra.mxu0 0
    %2231 = vmatprep.subr.bf16.mxu0 0
    %2232 = vmatpush1.bf16.msra.mxu0 0
    %2233 = vmatprep.subr.bf16.mxu0 0
    %2234 = vmatpush1.bf16.msra.mxu0 0
    %2235 = vmatprep.subr.bf16.mxu0 0
    %2236 = vmatpush1.bf16.msra.mxu0 0
    %2237 = vmatprep.subr.bf16.mxu0 0
    %2238 = vmatpush1.bf16.msra.mxu0 0
    %2239 = vmatprep.subr.bf16.mxu0 0
    %2240 = vmatpush1.bf16.msra.mxu0 0
    %2241 = vmatprep.subr.bf16.mxu0 0
    %2242 = vmatpush1.bf16.msra.mxu0 0
    %2243 = vmatprep.subr.bf16.mxu0 0
    %2244 = vmatpush1.bf16.msra.mxu0 0
    %2245 = vmatprep.subr.bf16.mxu0 0
    %2246 = vmatpush1.bf16.msra.mxu0 0
    %2247 = vmatprep.mubr.bf16.mxu0 0
    %2248 = vmatmul.mubr.bf16.gmra.mrb[0].mxu0 %v2213
    %v2249 = vpop.f32.mrb[0].mxu0
    %v2250 = vadd.f32 %v2205, %v2249
    %v2251 = vpop.f32.mrb[0].mxu0
    %v2252 = vpop.f32.mrb[0].mxu0
    %v2253 = vpop.f32.mrb[0].mxu0
    %2254 = vdwg.mxu0
    %v2255 = vadd.f32 %v2250, %v67
    %v2256 = vtanh.pop %v2255
    %2257 = vmatprep.subr.bf16.mxu0 0
    %2258 = vmatpush1.bf16.msra.mxu0 %v166
    %2259 = vmatprep.subr.bf16.mxu0 0
    %2260 = vmatpush1.bf16.msra.mxu0 %v167
    %2261 = vmatprep.subr.bf16.mxu0 0
    %2262 = vmatpush1.bf16.msra.mxu0 %v168
    %2263 = vmatprep.subr.bf16.mxu0 0
    %2264 = vmatpush1.bf16.msra.mxu0 %v169
    %2265 = vmatprep.subr.bf16.mxu0 0
    %2266 = vmatpush1.bf16.msra.mxu0 0
    %2267 = vmatprep.subr.bf16.mxu0 0
    %2268 = vmatpush1.bf16.msra.mxu0 0
    %2269 = vmatprep.subr.bf16.mxu0 0
    %2270 = vmatpush1.bf16.msra.mxu0 0
    %2271 = vmatprep.subr.bf16.mxu0 0
    %2272 = vmatpush1.bf16.msra.mxu0 0
    %2273 = vmatprep.subr.bf16.mxu0 0
    %2274 = vmatpush1.bf16.msra.mxu0 0
    %2275 = vmatprep.subr.bf16.mxu0 0
    %2276 = vmatpush1.bf16.msra.mxu0 0
    %2277 = vmatprep.subr.bf16.mxu0 0
    %2278 = vmatpush1.bf16.msra.mxu0 0
    %2279 = vmatprep.subr.bf16.mxu0 0
    %2280 = vmatpush1.bf16.msra.mxu0 0
    %2281 = vmatprep.subr.bf16.mxu0 0
    %2282 = vmatpush1.bf16.msra.mxu0 0
    %2283 = vmatprep.subr.bf16.mxu0 0
    %2284 = vmatpush1.bf16.msra.mxu0 0
    %2285 = vmatprep.subr.bf16.mxu0 0
    %2286 = vmatpush1.bf16.msra.mxu0 0
    %2287 = vmatprep.subr.bf16.mxu0 0
    %2288 = vmatpush1.bf16.msra.mxu0 0
    %2289 = vmatprep.mubr.bf16.mxu0 0
    %2290 = vmatmul.mubr.bf16.gmra.mrb[0].mxu0 %v2213
    %v2291 = vpop.f32.mrb[0].mxu0
    %v2292 = vadd.f32 0.0, %v2291
    %v2293 = vpop.f32.mrb[0].mxu0
    %v2294 = vpop.f32.mrb[0].mxu0
    %v2295 = vpop.f32.mrb[0].mxu0
    %2296 = vdwg.mxu0
    %v2298 = vrot.slane %v2292, 2
    %v2300 = vadd.f32 %v147, %v2298
    %v2301 = vtanh.pop %v2300
    %v2302 = vpack.c.bf16 %v2301, %v2301
    %v2303 = vpack.c.bf16 %v2256, %v2256
    %v2305 = vsel %vm174, %v2303, 0
    %2307 = vmatprep.subr.bf16.mxu0 0
    %2308 = vmatpush1.bf16.msra.mxu0 %v237
    %2309 = vmatprep.subr.bf16.mxu0 0
    %2310 = vmatpush1.bf16.msra.mxu0 %v238
    %2311 = vmatprep.subr.bf16.mxu0 0
    %2312 = vmatpush1.bf16.msra.mxu0 %v239
    %2313 = vmatprep.subr.bf16.mxu0 0
    %2314 = vmatpush1.bf16.msra.mxu0 %v240
    %2315 = vmatprep.subr.bf16.mxu0 0
    %2316 = vmatpush1.bf16.msra.mxu0 0
    %2317 = vmatprep.subr.bf16.mxu0 0
    %2318 = vmatpush1.bf16.msra.mxu0 0
    %2319 = vmatprep.subr.bf16.mxu0 0
    %2320 = vmatpush1.bf16.msra.mxu0 0
    %2321 = vmatprep.subr.bf16.mxu0 0
    %2322 = vmatpush1.bf16.msra.mxu0 0
    %2323 = vmatprep.subr.bf16.mxu0 0
    %2324 = vmatpush1.bf16.msra.mxu0 0
    %2325 = vmatprep.subr.bf16.mxu0 0
    %2326 = vmatpush1.bf16.msra.mxu0 0
    %2327 = vmatprep.subr.bf16.mxu0 0
    %2328 = vmatpush1.bf16.msra.mxu0 0
    %2329 = vmatprep.subr.bf16.mxu0 0
    %2330 = vmatpush1.bf16.msra.mxu0 0
    %2331 = vmatprep.subr.bf16.mxu0 0
    %2332 = vmatpush1.bf16.msra.mxu0 0
    %2333 = vmatprep.subr.bf16.mxu0 0
    %2334 = vmatpush1.bf16.msra.mxu0 0
    %2335 = vmatprep.subr.bf16.mxu0 0
    %2336 = vmatpush1.bf16.msra.mxu0 0
    %2337 = vmatprep.subr.bf16.mxu0 0
    %2338 = vmatpush1.bf16.msra.mxu0 0
    %2339 = vmatprep.mubr.bf16.mxu0 0
    %2340 = vmatmul.mubr.bf16.gmra.mrb[0].mxu0 %v2305
    %v2341 = vpop.f32.mrb[0].mxu0
    %v2342 = vadd.f32 0.0, %v2341
    %v2343 = vpop.f32.mrb[0].mxu0
    %v2344 = vpop.f32.mrb[0].mxu0
    %v2345 = vpop.f32.mrb[0].mxu0
    %2346 = vdwg.mxu0
    %v2348 = vrot.slane %v2302, 3
    %v2350 = vsel %vm174, %v2348, 0
    %2352 = vmatprep.subr.bf16.mxu0 0
    %2353 = vmatpush1.bf16.msra.mxu0 %v301
    %2354 = vmatprep.subr.bf16.mxu0 0
    %2355 = vmatpush1.bf16.msra.mxu0 %v302
    %2356 = vmatprep.subr.bf16.mxu0 0
    %2357 = vmatpush1.bf16.msra.mxu0 %v303
    %2358 = vmatprep.subr.bf16.mxu0 0
    %2359 = vmatpush1.bf16.msra.mxu0 %v304
    %2360 = vmatprep.subr.bf16.mxu0 0
    %2361 = vmatpush1.bf16.msra.mxu0 0
    %2362 = vmatprep.subr.bf16.mxu0 0
    %2363 = vmatpush1.bf16.msra.mxu0 0
    %2364 = vmatprep.subr.bf16.mxu0 0
    %2365 = vmatpush1.bf16.msra.mxu0 0
    %2366 = vmatprep.subr.bf16.mxu0 0
    %2367 = vmatpush1.bf16.msra.mxu0 0
    %2368 = vmatprep.subr.bf16.mxu0 0
    %2369 = vmatpush1.bf16.msra.mxu0 0
    %2370 = vmatprep.subr.bf16.mxu0 0
    %2371 = vmatpush1.bf16.msra.mxu0 0
    %2372 = vmatprep.subr.bf16.mxu0 0
    %2373 = vmatpush1.bf16.msra.mxu0 0
    %2374 = vmatprep.subr.bf16.mxu0 0
    %2375 = vmatpush1.bf16.msra.mxu0 0
    %2376 = vmatprep.subr.bf16.mxu0 0
    %2377 = vmatpush1.bf16.msra.mxu0 0
    %2378 = vmatprep.subr.bf16.mxu0 0
    %2379 = vmatpush1.bf16.msra.mxu0 0
    %2380 = vmatprep.subr.bf16.mxu0 0
    %2381 = vmatpush1.bf16.msra.mxu0 0
    %2382 = vmatprep.subr.bf16.mxu0 0
    %2383 = vmatpush1.bf16.msra.mxu0 0
    %2384 = vmatprep.mubr.bf16.mxu0 0
    %2385 = vmatmul.mubr.bf16.gmra.mrb[0].mxu0 %v2350
    %v2386 = vpop.f32.mrb[0].mxu0
    %v2387 = vadd.f32 %v2342, %v2386
    %v2388 = vpop.f32.mrb[0].mxu0
    %v2389 = vpop.f32.mrb[0].mxu0
    %v2390 = vpop.f32.mrb[0].mxu0
    %2391 = vdwg.mxu0
    %v2392 = vadd.f32 %v2387, %v67
    %v2393 = vtanh.pop %v2392
    %v2394 = vld [vmem:[%s7] sm:$0xff]
    %v2395 = vld [vmem:[%s7 + $0x8] sm:$0xff]
    %v2396 = vld [vmem:[%s7 + $0x10] sm:$0xff]
    %v2397 = vld [vmem:[%s7 + $0x18] sm:$0xff]
    %v2398 = vld [vmem:[%s7 + $0x20] sm:$0xff]
    %v2399 = vld [vmem:[%s7 + $0x28] sm:$0xff]
    %v2400 = vld [vmem:[%s7 + $0x30] sm:$0xff]
    %v2401 = vld [vmem:[%s7 + $0x38] sm:$0xff]
    %v2402 = vld [vmem:[%s8] sm:$0x1]
    %v2404 = vlaneseq
    %v2405 = vshrl.u32 %v2404, 7
    %v2406 = vsub.s32 0, %v2405
    %v2407 = vrot.slane %v2402, %v2406
    %v2410 = vsel %vm174, %v2393, 0
    %2412 = vmatprep.subr.mxu0 0.0
    %2413 = vmatpush1.msra.mxu0 %v2394
    %2414 = vmatprep.subr.mxu0 0.0
    %2415 = vmatpush1.msra.mxu0 %v2395
    %2416 = vmatprep.subr.mxu0 0.0
    %2417 = vmatpush1.msra.mxu0 %v2396
    %2418 = vmatprep.subr.mxu0 0.0
    %2419 = vmatpush1.msra.mxu0 %v2397
    %2420 = vmatprep.subr.mxu0 0.0
    %2421 = vmatpush1.msra.mxu0 %v2398
    %2422 = vmatprep.subr.mxu0 0.0
    %2423 = vmatpush1.msra.mxu0 %v2399
    %2424 = vmatprep.subr.mxu0 0.0
    %2425 = vmatpush1.msra.mxu0 %v2400
    %2426 = vmatprep.subr.mxu0 0.0
    %2427 = vmatpush1.msra.mxu0 %v2401
    %2428 = vmatprep.subr.mxu0 0.0
    %2429 = vmatpush1.msra.mxu0 0.0
    %2430 = vmatprep.subr.mxu0 0.0
    %2431 = vmatpush1.msra.mxu0 0.0
    %2432 = vmatprep.subr.mxu0 0.0
    %2433 = vmatpush1.msra.mxu0 0.0
    %2434 = vmatprep.subr.mxu0 0.0
    %2435 = vmatpush1.msra.mxu0 0.0
    %2436 = vmatprep.subr.mxu0 0.0
    %2437 = vmatpush1.msra.mxu0 0.0
    %2438 = vmatprep.subr.mxu0 0.0
    %2439 = vmatpush1.msra.mxu0 0.0
    %2440 = vmatprep.subr.mxu0 0.0
    %2441 = vmatpush1.msra.mxu0 0.0
    %2442 = vmatprep.subr.mxu0 0.0
    %2443 = vmatpush1.msra.mxu0 0.0
    %2444 = vmatprep.subr.mxu0 0.0
    %2445 = vmatpush1.msra.mxu0 0.0
    %2446 = vmatprep.subr.mxu0 0.0
    %2447 = vmatpush1.msra.mxu0 0.0
    %2448 = vmatprep.subr.mxu0 0.0
    %2449 = vmatpush1.msra.mxu0 0.0
    %2450 = vmatprep.subr.mxu0 0.0
    %2451 = vmatpush1.msra.mxu0 0.0
    %2452 = vmatprep.subr.mxu0 0.0
    %2453 = vmatpush1.msra.mxu0 0.0
    %2454 = vmatprep.subr.mxu0 0.0
    %2455 = vmatpush1.msra.mxu0 0.0
    %2456 = vmatprep.subr.mxu0 0.0
    %2457 = vmatpush1.msra.mxu0 0.0
    %2458 = vmatprep.subr.mxu0 0.0
    %2459 = vmatpush1.msra.mxu0 0.0
    %2460 = vmatprep.subr.mxu0 0.0
    %2461 = vmatpush1.msra.mxu0 0.0
    %2462 = vmatprep.subr.mxu0 0.0
    %2463 = vmatpush1.msra.mxu0 0.0
    %2464 = vmatprep.subr.mxu0 0.0
    %2465 = vmatpush1.msra.mxu0 0.0
    %2466 = vmatprep.subr.mxu0 0.0
    %2467 = vmatpush1.msra.mxu0 0.0
    %2468 = vmatprep.subr.mxu0 0.0
    %2469 = vmatpush1.msra.mxu0 0.0
    %2470 = vmatprep.subr.mxu0 0.0
    %2471 = vmatpush1.msra.mxu0 0.0
    %2472 = vmatprep.subr.mxu0 0.0
    %2473 = vmatpush1.msra.mxu0 0.0
    %2474 = vmatprep.subr.mxu0 0.0
    %2475 = vmatpush1.msra.mxu0 0.0
    %2476 = vmatprep.mubr.f32.mxu0 0.0
    %2477 = vmatmul.mubr.f32.gmra.mrb[0].mxu0 %v2410
    %v2478 = vpop.f32.mrb[0].mxu0
    %v2479 = vadd.f32 %v2407, %v2478
    %v2480 = vpop.f32.mrb[0].mxu0
    %2481 = vdwg.mxu0
    %vm2482 = vcmask 25600
    %2483 = vst.msk [vmem:[#allocation2] sm:$0x3] %vm2482, %v2479
    // Predicated region
    $region38: #{rnn_forward.1} parent=1 // pred_check
      _
    $region39: #{rnn_forward.1} parent=1 // pred_check_branch
      %2485 = sbr.rel (0) target = $region41
    $region40: #{rnn_forward.1} parent=1 // pred_region
      %s2487 = ssub.s32 32, 32
      %2488 = vsyncadd [#allocation3], %s2487
      %s2490 = sshll.u32 [#allocation2], 4
      %s2491 = int_to_ptr.vmem [resolvable:$true] %s2490
      %2493 = dma.vmem_to_hbm [thread:$0]  %s2491, 32, %s9, [#allocation3]
    $region41: #{rnn_forward.1} parent=1 // pred_fallthru
      _
    // Predicated region
    $region42: #{rnn_forward.1} parent=1 // pred_check
      _
    $region43: #{rnn_forward.1} parent=1 // pred_check_branch
      %2495 = sbr.rel (0) target = $region45
    $region44: #{rnn_forward.1} parent=1 // pred_region
      %2496 = dma.done [#allocation3], 32
    $region45: #{rnn_forward.1} parent=1 // pred_fallthru
      _
    %2497 = vsyncpa [#allocation3], 1

</llo_original>
